<compile_context>
chip_gen: v6e
topology: v6e:2x2x1
jax: 0.10.0
libtpu: 0.0.40
codegen_flags: <defaults>
</compile_context>

<pallas_src>
import functools
import math

import jax
import jax.numpy as jnp
from jax.experimental import pallas as pl
from jax.experimental.pallas import tpu as pltpu


def _round_up(x, m):
    return ((x + m - 1) // m) * m


def _vmem_capacity_bytes():
    """Best-effort per-core VMEM capacity; conservative default (v7x: 64 MiB)."""
    try:
        cap = int(pltpu.get_tpu_info().vmem_capacity_bytes)
        if (8 << 20) <= cap <= (512 << 20):
            return cap
    except Exception:
        pass
    return 64 << 20


def _num_tensorcores():
    """Best-effort TensorCores-per-chip query (2 on v7x, 1 on v5e/v6e)."""
    try:
        info = pltpu.get_tpu_info()
        for attr in ("num_cores", "num_tensorcores", "tensorcores_per_chip",
                     "cores_per_chip", "core_count"):
            v = getattr(info, attr, None)
            if v:
                return max(1, int(v))
    except Exception:
        pass
    return 1


# ----------------------------------------------------------------------------
# Pallas kernel: the recurrent chain only.
# ----------------------------------------------------------------------------
def _rnn_recurrent_kernel(z_ref, h0_ref, whh_t_ref, out_ref, h_scratch,
                          *, nonlinearity, t_block):
    """h_t = act(z_t + h_{t-1} @ W_hh^T) over one (batch block, time block).

    Grid = (batch_blocks, time_blocks).  NOTE: the h_scratch carry is only
    valid with batch as the OUTER ('parallel') axis and time as the INNER
    ('arbitrary', sequential) axis.

    z_ref:     (Tt, Bb, Hp) pre-projected input block (compute dtype)
    h0_ref:    (Bb, Hp)     initial hidden state (f32), single-buffered
    whh_t_ref: (Hp, Hp)     W_hh^T in compute dtype (bf16/f32), single-buffered
    out_ref:   (Tt, Bb, Hp) hidden-state output block (model dtype)
    h_scratch: (Bb, Hp)     persistent f32 hidden-state carry
    """
    tb = pl.program_id(1)

    @pl.when(tb == 0)
    def _():
        h_scratch[...] = h0_ref[...]

    whh = whh_t_ref[...]          # kept in stored (bf16) dtype -> MXU-native
    mm_dtype = whh.dtype

    def step(i, h):
        # f32 elementwise path; bf16 (or f32) MXU operands; f32 accumulation.
        pre = z_ref[i].astype(jnp.float32) + jnp.dot(
            h.astype(mm_dtype), whh, preferred_element_type=jnp.float32)
        if nonlinearity == "tanh":
            h_new = jnp.tanh(pre)
        else:  # relu
            h_new = jnp.maximum(pre, 0.0)
        out_ref[i] = h_new.astype(out_ref.dtype)
        return h_new

    h = jax.lax.fori_loop(0, t_block, step, h_scratch[...], unroll=True)
    h_scratch[...] = h


# ----------------------------------------------------------------------------
# Tiling / pallas_call wrapper.
# ----------------------------------------------------------------------------
def _choose_tiles(T, B, Hp, z_itemsize, out_itemsize, w_itemsize,
                  t_block, b_block, num_cores, capacity):
    # Batch block: the full (padded) batch, capped at b_block rows.  Keeps the
    # MXU M-dimension at 128-256 rows instead of collapsing to 8-row matmuls.
    b_valid = _round_up(max(B, 1), 8)
    Bb = min(_round_up(b_block, 8), b_valid)
    # v7x has 2 TensorCores: make the parallel batch axis have >= 2 blocks.
    if num_cores >= 2 and b_valid >= 16 and _round_up(B, Bb) // Bb < 2:
        Bb = _round_up(b_valid // 2, 8)
    Bp = _round_up(B, Bb)

    budget = int(0.70 * capacity)
    Tt = max(1, min(t_block, T))

    def vmem_bytes(tt):
        return (2 * tt * Bb * Hp * z_itemsize       # z block, double-buffered
                + 2 * tt * Bb * Hp * out_itemsize   # out block, double-buffered
                + Hp * Hp * w_itemsize              # W_hh^T, single-buffered
                + Bb * Hp * 4                       # h0, single-buffered
                + Bb * Hp * 4)                      # f32 h-carry scratch

    while Tt > 1 and vmem_bytes(Tt) > budget:
        Tt = max(1, Tt // 2)
    Tp = _round_up(T, Tt)
    vmem_limit = min(int(0.90 * capacity),
                     max(vmem_bytes(Tt) + (8 << 20), 32 << 20))
    return Tt, Tp, Bb, Bp, vmem_limit


def rnn_recurrence_pallas(z_p, h0_p, whh_t_p, *, nonlinearity, out_dtype,
                          t_block, b_block_rows, vmem_limit_bytes):
    """Run the recurrence over padded (Tp, Bp, Hp) inputs."""
    Tp, Bp, Hp = z_p.shape
    Tt, Bb = t_block, b_block_rows
    assert Tp % Tt == 0 and Bp % Bb == 0
    # Batch OUTER (parallel), time INNER (sequential) -- required for the
    # h_scratch carry; do not reorder.
    grid = (Bp // Bb, Tp // Tt)

    cost = pl.CostEstimate(
        flops=2 * Tp * Bp * Hp * Hp,
        transcendentals=(Tp * Bp * Hp) if nonlinearity == "tanh" else 0,
        bytes_accessed=(z_p.size * z_p.dtype.itemsize
                        + Tp * Bp * Hp * jnp.dtype(out_dtype).itemsize
                        + whh_t_p.size * whh_t_p.dtype.itemsize
                        + h0_p.size * h0_p.dtype.itemsize),
    )

    def build(single_buffer_invariants):
        def inv_spec(shape, index_map):
            if single_buffer_invariants:
                return pl.BlockSpec(shape, index_map,
                                    pipeline_mode=pl.Buffered(1))
            return pl.BlockSpec(shape, index_map)

        return pl.pallas_call(
            functools.partial(_rnn_recurrent_kernel,
                              nonlinearity=nonlinearity, t_block=Tt),
            out_shape=jax.ShapeDtypeStruct((Tp, Bp, Hp), out_dtype),
            grid_spec=pltpu.PrefetchScalarGridSpec(
                num_scalar_prefetch=0,
                grid=grid,
                in_specs=[
                    pl.BlockSpec((Tt, Bb, Hp), lambda b, t: (t, b, 0)),  # z
                    inv_spec((Bb, Hp), lambda b, t: (b, 0)),             # h0
                    inv_spec((Hp, Hp), lambda b, t: (0, 0)),             # Whh^T
                ],
                out_specs=pl.BlockSpec((Tt, Bb, Hp), lambda b, t: (t, b, 0)),
                scratch_shapes=[pltpu.VMEM((Bb, Hp), jnp.float32)],      # carry
            ),
            compiler_params=pltpu.CompilerParams(
                dimension_semantics=("parallel", "arbitrary"),
                vmem_limit_bytes=int(vmem_limit_bytes)),
            cost_estimate=cost,
        )

    try:
        return build(True)(z_p, h0_p, whh_t_p)
    except Exception:
        # Fallback if single-buffering via pl.Buffered(1) is unsupported in
        # the installed jax: identical kernel with default double-buffering.
        return build(False)(z_p, h0_p, whh_t_p)


# ----------------------------------------------------------------------------
# RNNBase-equivalent module (forward pass).
# ----------------------------------------------------------------------------
class RNNBasePallas:
    """Minimal RNNBase (RNN_TANH / RNN_RELU) forward: unidirectional,
    bias=True, supports batch_first and an optional initial hidden state hx;
    dropout is ignored (eval-mode forward)."""

    def __init__(self, mode, input_size, hidden_size, num_layers=1,
                 bias=True, batch_first=False, dropout=0.0,
                 bidirectional=False, seed=0, compute_dtype=jnp.bfloat16,
                 t_block=None, b_block=None):
        if mode not in ("RNN_TANH", "RNN_RELU"):
            raise ValueError("Unrecognized RNN mode: " + mode)
        if bidirectional:
            # TODO(synk): bidirectional (reverse pass + concat) not implemented.
            raise NotImplementedError("bidirectional not supported")
        if not bias:
            raise NotImplementedError("bias=False not supported")
        self.mode = mode
        self.nonlinearity = "tanh" if mode == "RNN_TANH" else "relu"
        self.input_size = input_size
        self.hidden_size = hidden_size
        self.num_layers = num_layers
        self.batch_first = batch_first
        # TODO(synk): inter-layer dropout (training mode) not applied.
        self.dropout = float(dropout)
        self.compute_dtype = compute_dtype
        self.t_block = t_block
        self.b_block = b_block
        self._Hp = _round_up(hidden_size, 128)

        # reset_parameters(): uniform(-stdv, stdv), stdv = 1/sqrt(hidden_size)
        stdv = 1.0 / math.sqrt(hidden_size)
        key = jax.random.PRNGKey(seed)
        self.weights = []        # raw (w_ih, w_hh, b_ih, b_hh), PyTorch layout
        self._layer_params = []  # prepped (wih_t_p, whh_t_p, bias_p) -- once
        pad_h = self._Hp - hidden_size
        for layer in range(num_layers):
            lin = input_size if layer == 0 else hidden_size
            key, k1, k2, k3, k4 = jax.random.split(key, 5)
            w_ih = jax.random.uniform(k1, (hidden_size, lin), jnp.float32, -stdv, stdv)
            w_hh = jax.random.uniform(k2, (hidden_size, hidden_size), jnp.float32, -stdv, stdv)
            b_ih = jax.random.uniform(k3, (hidden_size,), jnp.float32, -stdv, stdv)
            b_hh = jax.random.uniform(k4, (hidden_size,), jnp.float32, -stdv, stdv)
            self.weights.append((w_ih, w_hh, b_ih, b_hh))
            # Layer > 0 inputs arrive already padded to Hp lanes; padded rows
            # of W_ih^T are zero so they contribute nothing (exact).
            in_pad = 0 if layer == 0 else pad_h
            wih_t_p = jnp.pad(w_ih.T, ((0, in_pad), (0, pad_h)))
            whh_t_p = jnp.pad(w_hh.T, ((0, pad_h), (0, pad_h))).astype(compute_dtype)
            bias_p = jnp.pad(b_ih + b_hh, (0, pad_h))
            self._layer_params.append((wih_t_p, whh_t_p, bias_p))

    def __call__(self, x, hx=None):
        if self.batch_first:
            x = jnp.swapaxes(x, 0, 1)              # -> (T, B, I)
        T, B, _ = x.shape
        H, Hp, L = self.hidden_size, self._Hp, self.num_layers
        out_dtype = x.dtype

        capacity = _vmem_capacity_bytes()
        # Generation-specific defaults: larger time blocks when VMEM is large
        # (v5e/v6e: 128 MiB) and smaller on v7x (64 MiB).
        t_block = self.t_block or (32 if capacity >= (96 << 20) else 16)
        b_block = self.b_block or (256 if capacity >= (96 << 20) else 128)
        z_sz = jnp.dtype(self.compute_dtype).itemsize
        out_sz = jnp.dtype(out_dtype).itemsize
        Tt, Tp, Bb, Bp, vmem_limit = _choose_tiles(
            T, B, Hp, z_sz, out_sz, z_sz, t_block, b_block,
            _num_tensorcores(), capacity)

        # Pad once; the whole multi-layer pipeline runs at padded (Tp, Bp, Hp).
        # Zero padding is exact for tanh/relu; padded rows/steps are discarded.
        x_p = jnp.pad(x, ((0, Tp - T), (0, Bp - B), (0, 0)))
        if hx is None:
            hx_p = jnp.zeros((L, Bp, Hp), jnp.float32)
        else:
            hx_p = jnp.pad(hx.astype(jnp.float32),
                           ((0, 0), (0, Bp - B), (0, Hp - H)))

        layer_in = x_p
        h_ns = []
        for layer in range(L):
            wih_t_p, whh_t_p, bias_p = self._layer_params[layer]
            lin = layer_in.shape[-1]
            # Non-recurrent projection hoisted out of the serial kernel: one
            # big MXU matmul per layer; z stored in compute dtype (bf16).
            z = (jnp.dot(layer_in.reshape(Tp * Bp, lin), wih_t_p,
                         preferred_element_type=jnp.float32)
                 .reshape(Tp, Bp, Hp) + bias_p).astype(self.compute_dtype)
            out_p = rnn_recurrence_pallas(
                z, hx_p[layer], whh_t_p,
                nonlinearity=self.nonlinearity, out_dtype=out_dtype,
                t_block=Tt, b_block_rows=Bb, vmem_limit_bytes=vmem_limit)
            h_ns.append(out_p[T - 1, :B, :H])
            layer_in = out_p

        output = layer_in[:T, :B, :H]
        hidden = jnp.stack(h_ns, axis=0)            # (num_layers, B, H)
        if self.batch_first:
            output = jnp.swapaxes(output, 0, 1)
        return output, hidden


# ----------------------------------------------------------------------------
# Pure-JAX reference (lax.scan) for verification.
# ----------------------------------------------------------------------------
def _rnn_reference(x, weights, nonlinearity, hx=None):
    act = jnp.tanh if nonlinearity == "tanh" else (lambda v: jnp.maximum(v, 0.0))
    layer_in = x
    h_ns = []
    for li, (w_ih, w_hh, b_ih, b_hh) in enumerate(weights):
        B = layer_in.shape[1]
        H = w_hh.shape[0]
        h0 = jnp.zeros((B, H), jnp.float32) if hx is None else hx[li]

        def step(h, xt, w_ih=w_ih, w_hh=w_hh, b_ih=b_ih, b_hh=b_hh):
            h_new = act(xt @ w_ih.T + b_ih + h @ w_hh.T + b_hh)
            return h_new, h_new

        h_last, outs = jax.lax.scan(step, h0, layer_in)
        h_ns.append(h_last)
        layer_in = outs
    return layer_in, jnp.stack(h_ns, axis=0)


if __name__ == "__main__":
    T, B, I, H, L = 8, 4, 16, 32, 2

    key = jax.random.PRNGKey(0)
    kx, kh = jax.random.split(key)
    x = jax.random.normal(kx, (T, B, I), jnp.float32)   # (seq, batch, input)

    # ---- float32 compute path: tight semantic check vs pure-JAX reference.
    model_f32 = RNNBasePallas("RNN_TANH", input_size=I, hidden_size=H,
                              num_layers=L, seed=0, compute_dtype=jnp.float32)
    out, hidden = model_f32(x)
    out = jax.block_until_ready(out)
    hidden = jax.block_until_ready(hidden)
    ref_out, ref_hidden = _rnn_reference(x, model_f32.weights, "tanh")
    assert out.shape == (T, B, H) and hidden.shape == (L, B, H)
    assert jnp.allclose(out, ref_out, atol=1e-5, rtol=1e-5)
    assert jnp.allclose(hidden, ref_hidden, atol=1e-5, rtol=1e-5)

    # Explicit non-zero initial hidden state.
    hx = 0.1 * jax.random.normal(kh, (L, B, H), jnp.float32)
    out2, hidden2 = model_f32(x, hx)
    out2 = jax.block_until_ready(out2)
    ref_out2, ref_hidden2 = _rnn_reference(x, model_f32.weights, "tanh", hx)
    assert jnp.allclose(out2, ref_out2, atol=1e-5, rtol=1e-5)
    assert jnp.allclose(hidden2, ref_hidden2, atol=1e-5, rtol=1e-5)

    # RNN_RELU mode (float32 path, tight tolerance).
    model_relu = RNNBasePallas("RNN_RELU", input_size=I, hidden_size=H,
                               num_layers=1, seed=1, compute_dtype=jnp.float32)
    out3, hidden3 = model_relu(x)
    out3 = jax.block_until_ready(out3)
    ref_out3, ref_hidden3 = _rnn_reference(x, model_relu.weights, "relu")
    assert jnp.allclose(out3, ref_out3, atol=1e-5, rtol=1e-5)
    assert jnp.allclose(hidden3, ref_hidden3, atol=1e-5, rtol=1e-5)

    # ---- default performance path: bf16 MXU operands + bf16 z HBM stream,
    # f32 hidden-state carry/accumulation -> only small rounding deltas.
    model_bf16 = RNNBasePallas("RNN_TANH", input_size=I, hidden_size=H,
                               num_layers=L, seed=0)   # compute_dtype=bfloat16
    out4, hidden4 = model_bf16(x)
    out4 = jax.block_until_ready(out4)
    hidden4 = jax.block_until_ready(hidden4)
    assert jnp.allclose(out4, ref_out, atol=7.5e-2, rtol=5e-2)
    assert jnp.allclose(hidden4, ref_hidden, atol=7.5e-2, rtol=5e-2)

    print("KERNEL_OK")
</pallas_src>

<mosaic_0001>
module attributes {stable_mosaic.version = 11 : i64} {
  func.func @_rnn_recurrent_kernel(%arg0: i32, %arg1: i32, %arg2: memref<8x8x128xf32, #tpu.memory_space<vmem>>, %arg3: memref<8x128xf32, #tpu.memory_space<vmem>>, %arg4: memref<128x128xf32, #tpu.memory_space<vmem>>, %arg5: memref<8x8x128xf32, #tpu.memory_space<vmem>>, %arg6: memref<8x128xf32, #tpu.memory_space<vmem>>) attributes {dimension_semantics = [#tpu.dimension_semantics<parallel>, #tpu.dimension_semantics<arbitrary>], iteration_bounds = array<i64: 1, 1>, scalar_prefetch = 0 : i64, scratch_operands = 1 : i64, tpu.core_type = #tpu.core_type<tc>, window_params = [{transform_indices = @transform_0, window_bounds = array<i64: 8, 8, 128>}, {pipeline_mode = #tpu.pipeline_mode<synchronous>, transform_indices = @transform_1, window_bounds = array<i64: 8, 128>}, {pipeline_mode = #tpu.pipeline_mode<synchronous>, transform_indices = @transform_2, window_bounds = array<i64: 128, 128>}, {transform_indices = @transform_3, window_bounds = array<i64: 8, 8, 128>}]} {
    %c0_i32 = arith.constant 0 : i32
    %0 = arith.cmpi eq, %arg1, %c0_i32 : i32
    %1 = arith.extui %0 : i1 to i32
    %c0_i32_0 = arith.constant 0 : i32
    %2 = arith.cmpi ne, %1, %c0_i32_0 : i32
    scf.if %2 {
      %c0_46 = arith.constant 0 : index
      %c0_47 = arith.constant 0 : index
      %86 = vector.load %arg3[%c0_46, %c0_47] : memref<8x128xf32, #tpu.memory_space<vmem>>, vector<8x128xf32>
      %c0_48 = arith.constant 0 : index
      %c0_49 = arith.constant 0 : index
      %87 = vector.load %arg6[%c0_48, %c0_49] : memref<8x128xf32, #tpu.memory_space<vmem>>, vector<8x128xf32>
      tpu.vector_store %arg6[%c0_48, %c0_49], %86 {strides = array<i32>} : memref<8x128xf32, #tpu.memory_space<vmem>>, vector<8x128xf32>,
    } else {
    }
    %c0 = arith.constant 0 : index
    %c0_1 = arith.constant 0 : index
    %3 = vector.load %arg4[%c0, %c0_1] : memref<128x128xf32, #tpu.memory_space<vmem>>, vector<128x128xf32>
    %c0_2 = arith.constant 0 : index
    %c0_3 = arith.constant 0 : index
    %4 = vector.load %arg6[%c0_2, %c0_3] : memref<8x128xf32, #tpu.memory_space<vmem>>, vector<8x128xf32>
    %c0_i32_4 = arith.constant 0 : i32
    %5 = arith.index_cast %c0_i32_4 : i32 to index
    %c0_5 = arith.constant 0 : index
    %c0_6 = arith.constant 0 : index
    %6 = vector.load %arg2[%5, %c0_5, %c0_6] : memref<8x8x128xf32, #tpu.memory_space<vmem>>, vector<1x8x128xf32>
    %7 = vector.shape_cast %6 : vector<1x8x128xf32> to vector<8x128xf32>
    %cst = arith.constant dense<0.000000e+00> : vector<8x128xf32>
    %8 = tpu.matmul %4, %3, %cst {dimension_numbers = #tpu.dot_dimension_numbers<[1], [0], [0], [1], [0, 0, 1, 1], [], []>} : vector<8x128xf32>, vector<128x128xf32>, vector<8x128xf32> -> vector<8x128xf32>
    %9 = arith.addf %7, %8 : vector<8x128xf32>
    %10 = math.tanh %9 : vector<8x128xf32>
    %11 = arith.index_cast %c0_i32_4 : i32 to index
    %c0_7 = arith.constant 0 : index
    %c0_8 = arith.constant 0 : index
    %12 = vector.load %arg5[%11, %c0_7, %c0_8] : memref<8x8x128xf32, #tpu.memory_space<vmem>>, vector<1x8x128xf32>
    %13 = vector.shape_cast %12 : vector<1x8x128xf32> to vector<8x128xf32>
    %14 = vector.shape_cast %10 : vector<8x128xf32> to vector<1x8x128xf32>
    tpu.vector_store %arg5[%11, %c0_7, %c0_8], %14 {strides = array<i32>} : memref<8x8x128xf32, #tpu.memory_space<vmem>>, vector<1x8x128xf32>,
    %c1_i32 = arith.constant 1 : i32
    %15 = arith.index_cast %c1_i32 : i32 to index
    %c0_9 = arith.constant 0 : index
    %c0_10 = arith.constant 0 : index
    %16 = vector.load %arg2[%15, %c0_9, %c0_10] : memref<8x8x128xf32, #tpu.memory_space<vmem>>, vector<1x8x128xf32>
    %17 = vector.shape_cast %16 : vector<1x8x128xf32> to vector<8x128xf32>
    %cst_11 = arith.constant dense<0.000000e+00> : vector<8x128xf32>
    %18 = tpu.matmul %10, %3, %cst_11 {dimension_numbers = #tpu.dot_dimension_numbers<[1], [0], [0], [1], [0, 0, 1, 1], [], []>} : vector<8x128xf32>, vector<128x128xf32>, vector<8x128xf32> -> vector<8x128xf32>
    %19 = arith.addf %17, %18 : vector<8x128xf32>
    %20 = math.tanh %19 : vector<8x128xf32>
    %21 = arith.index_cast %c1_i32 : i32 to index
    %c0_12 = arith.constant 0 : index
    %c0_13 = arith.constant 0 : index
    %22 = vector.load %arg5[%21, %c0_12, %c0_13] : memref<8x8x128xf32, #tpu.memory_space<vmem>>, vector<1x8x128xf32>
    %23 = vector.shape_cast %22 : vector<1x8x128xf32> to vector<8x128xf32>
    %24 = vector.shape_cast %20 : vector<8x128xf32> to vector<1x8x128xf32>
    tpu.vector_store %arg5[%21, %c0_12, %c0_13], %24 {strides = array<i32>} : memref<8x8x128xf32, #tpu.memory_space<vmem>>, vector<1x8x128xf32>,
    %c2_i32 = arith.constant 2 : i32
    %25 = arith.index_cast %c2_i32 : i32 to index
    %c0_14 = arith.constant 0 : index
    %c0_15 = arith.constant 0 : index
    %26 = vector.load %arg2[%25, %c0_14, %c0_15] : memref<8x8x128xf32, #tpu.memory_space<vmem>>, vector<1x8x128xf32>
    %27 = vector.shape_cast %26 : vector<1x8x128xf32> to vector<8x128xf32>
    %cst_16 = arith.constant dense<0.000000e+00> : vector<8x128xf32>
    %28 = tpu.matmul %20, %3, %cst_16 {dimension_numbers = #tpu.dot_dimension_numbers<[1], [0], [0], [1], [0, 0, 1, 1], [], []>} : vector<8x128xf32>, vector<128x128xf32>, vector<8x128xf32> -> vector<8x128xf32>
    %29 = arith.addf %27, %28 : vector<8x128xf32>
    %30 = math.tanh %29 : vector<8x128xf32>
    %31 = arith.index_cast %c2_i32 : i32 to index
    %c0_17 = arith.constant 0 : index
    %c0_18 = arith.constant 0 : index
    %32 = vector.load %arg5[%31, %c0_17, %c0_18] : memref<8x8x128xf32, #tpu.memory_space<vmem>>, vector<1x8x128xf32>
    %33 = vector.shape_cast %32 : vector<1x8x128xf32> to vector<8x128xf32>
    %34 = vector.shape_cast %30 : vector<8x128xf32> to vector<1x8x128xf32>
    tpu.vector_store %arg5[%31, %c0_17, %c0_18], %34 {strides = array<i32>} : memref<8x8x128xf32, #tpu.memory_space<vmem>>, vector<1x8x128xf32>,
    %c3_i32 = arith.constant 3 : i32
    %35 = arith.index_cast %c3_i32 : i32 to index
    %c0_19 = arith.constant 0 : index
    %c0_20 = arith.constant 0 : index
    %36 = vector.load %arg2[%35, %c0_19, %c0_20] : memref<8x8x128xf32, #tpu.memory_space<vmem>>, vector<1x8x128xf32>
    %37 = vector.shape_cast %36 : vector<1x8x128xf32> to vector<8x128xf32>
    %cst_21 = arith.constant dense<0.000000e+00> : vector<8x128xf32>
    %38 = tpu.matmul %30, %3, %cst_21 {dimension_numbers = #tpu.dot_dimension_numbers<[1], [0], [0], [1], [0, 0, 1, 1], [], []>} : vector<8x128xf32>, vector<128x128xf32>, vector<8x128xf32> -> vector<8x128xf32>
    %39 = arith.addf %37, %38 : vector<8x128xf32>
    %40 = math.tanh %39 : vector<8x128xf32>
    %41 = arith.index_cast %c3_i32 : i32 to index
    %c0_22 = arith.constant 0 : index
    %c0_23 = arith.constant 0 : index
    %42 = vector.load %arg5[%41, %c0_22, %c0_23] : memref<8x8x128xf32, #tpu.memory_space<vmem>>, vector<1x8x128xf32>
    %43 = vector.shape_cast %42 : vector<1x8x128xf32> to vector<8x128xf32>
    %44 = vector.shape_cast %40 : vector<8x128xf32> to vector<1x8x128xf32>
    tpu.vector_store %arg5[%41, %c0_22, %c0_23], %44 {strides = array<i32>} : memref<8x8x128xf32, #tpu.memory_space<vmem>>, vector<1x8x128xf32>,
    %c4_i32 = arith.constant 4 : i32
    %45 = arith.index_cast %c4_i32 : i32 to index
    %c0_24 = arith.constant 0 : index
    %c0_25 = arith.constant 0 : index
    %46 = vector.load %arg2[%45, %c0_24, %c0_25] : memref<8x8x128xf32, #tpu.memory_space<vmem>>, vector<1x8x128xf32>
    %47 = vector.shape_cast %46 : vector<1x8x128xf32> to vector<8x128xf32>
    %cst_26 = arith.constant dense<0.000000e+00> : vector<8x128xf32>
    %48 = tpu.matmul %40, %3, %cst_26 {dimension_numbers = #tpu.dot_dimension_numbers<[1], [0], [0], [1], [0, 0, 1, 1], [], []>} : vector<8x128xf32>, vector<128x128xf32>, vector<8x128xf32> -> vector<8x128xf32>
    %49 = arith.addf %47, %48 : vector<8x128xf32>
    %50 = math.tanh %49 : vector<8x128xf32>
    %51 = arith.index_cast %c4_i32 : i32 to index
    %c0_27 = arith.constant 0 : index
    %c0_28 = arith.constant 0 : index
    %52 = vector.load %arg5[%51, %c0_27, %c0_28] : memref<8x8x128xf32, #tpu.memory_space<vmem>>, vector<1x8x128xf32>
    %53 = vector.shape_cast %52 : vector<1x8x128xf32> to vector<8x128xf32>
    %54 = vector.shape_cast %50 : vector<8x128xf32> to vector<1x8x128xf32>
    tpu.vector_store %arg5[%51, %c0_27, %c0_28], %54 {strides = array<i32>} : memref<8x8x128xf32, #tpu.memory_space<vmem>>, vector<1x8x128xf32>,
    %c5_i32 = arith.constant 5 : i32
    %55 = arith.index_cast %c5_i32 : i32 to index
    %c0_29 = arith.constant 0 : index
    %c0_30 = arith.constant 0 : index
    %56 = vector.load %arg2[%55, %c0_29, %c0_30] : memref<8x8x128xf32, #tpu.memory_space<vmem>>, vector<1x8x128xf32>
    %57 = vector.shape_cast %56 : vector<1x8x128xf32> to vector<8x128xf32>
    %cst_31 = arith.constant dense<0.000000e+00> : vector<8x128xf32>
    %58 = tpu.matmul %50, %3, %cst_31 {dimension_numbers = #tpu.dot_dimension_numbers<[1], [0], [0], [1], [0, 0, 1, 1], [], []>} : vector<8x128xf32>, vector<128x128xf32>, vector<8x128xf32> -> vector<8x128xf32>
    %59 = arith.addf %57, %58 : vector<8x128xf32>
    %60 = math.tanh %59 : vector<8x128xf32>
    %61 = arith.index_cast %c5_i32 : i32 to index
    %c0_32 = arith.constant 0 : index
    %c0_33 = arith.constant 0 : index
    %62 = vector.load %arg5[%61, %c0_32, %c0_33] : memref<8x8x128xf32, #tpu.memory_space<vmem>>, vector<1x8x128xf32>
    %63 = vector.shape_cast %62 : vector<1x8x128xf32> to vector<8x128xf32>
    %64 = vector.shape_cast %60 : vector<8x128xf32> to vector<1x8x128xf32>
    tpu.vector_store %arg5[%61, %c0_32, %c0_33], %64 {strides = array<i32>} : memref<8x8x128xf32, #tpu.memory_space<vmem>>, vector<1x8x128xf32>,
    %c6_i32 = arith.constant 6 : i32
    %65 = arith.index_cast %c6_i32 : i32 to index
    %c0_34 = arith.constant 0 : index
    %c0_35 = arith.constant 0 : index
    %66 = vector.load %arg2[%65, %c0_34, %c0_35] : memref<8x8x128xf32, #tpu.memory_space<vmem>>, vector<1x8x128xf32>
    %67 = vector.shape_cast %66 : vector<1x8x128xf32> to vector<8x128xf32>
    %cst_36 = arith.constant dense<0.000000e+00> : vector<8x128xf32>
    %68 = tpu.matmul %60, %3, %cst_36 {dimension_numbers = #tpu.dot_dimension_numbers<[1], [0], [0], [1], [0, 0, 1, 1], [], []>} : vector<8x128xf32>, vector<128x128xf32>, vector<8x128xf32> -> vector<8x128xf32>
    %69 = arith.addf %67, %68 : vector<8x128xf32>
    %70 = math.tanh %69 : vector<8x128xf32>
    %71 = arith.index_cast %c6_i32 : i32 to index
    %c0_37 = arith.constant 0 : index
    %c0_38 = arith.constant 0 : index
    %72 = vector.load %arg5[%71, %c0_37, %c0_38] : memref<8x8x128xf32, #tpu.memory_space<vmem>>, vector<1x8x128xf32>
    %73 = vector.shape_cast %72 : vector<1x8x128xf32> to vector<8x128xf32>
    %74 = vector.shape_cast %70 : vector<8x128xf32> to vector<1x8x128xf32>
    tpu.vector_store %arg5[%71, %c0_37, %c0_38], %74 {strides = array<i32>} : memref<8x8x128xf32, #tpu.memory_space<vmem>>, vector<1x8x128xf32>,
    %c7_i32 = arith.constant 7 : i32
    %75 = arith.index_cast %c7_i32 : i32 to index
    %c0_39 = arith.constant 0 : index
    %c0_40 = arith.constant 0 : index
    %76 = vector.load %arg2[%75, %c0_39, %c0_40] : memref<8x8x128xf32, #tpu.memory_space<vmem>>, vector<1x8x128xf32>
    %77 = vector.shape_cast %76 : vector<1x8x128xf32> to vector<8x128xf32>
    %cst_41 = arith.constant dense<0.000000e+00> : vector<8x128xf32>
    %78 = tpu.matmul %70, %3, %cst_41 {dimension_numbers = #tpu.dot_dimension_numbers<[1], [0], [0], [1], [0, 0, 1, 1], [], []>} : vector<8x128xf32>, vector<128x128xf32>, vector<8x128xf32> -> vector<8x128xf32>
    %79 = arith.addf %77, %78 : vector<8x128xf32>
    %80 = math.tanh %79 : vector<8x128xf32>
    %81 = arith.index_cast %c7_i32 : i32 to index
    %c0_42 = arith.constant 0 : index
    %c0_43 = arith.constant 0 : index
    %82 = vector.load %arg5[%81, %c0_42, %c0_43] : memref<8x8x128xf32, #tpu.memory_space<vmem>>, vector<1x8x128xf32>
    %83 = vector.shape_cast %82 : vector<1x8x128xf32> to vector<8x128xf32>
    %84 = vector.shape_cast %80 : vector<8x128xf32> to vector<1x8x128xf32>
    tpu.vector_store %arg5[%81, %c0_42, %c0_43], %84 {strides = array<i32>} : memref<8x8x128xf32, #tpu.memory_space<vmem>>, vector<1x8x128xf32>,
    %c8_i32 = arith.constant 8 : i32
    %c0_44 = arith.constant 0 : index
    %c0_45 = arith.constant 0 : index
    %85 = vector.load %arg6[%c0_44, %c0_45] : memref<8x128xf32, #tpu.memory_space<vmem>>, vector<8x128xf32>
    tpu.vector_store %arg6[%c0_44, %c0_45], %80 {strides = array<i32>} : memref<8x128xf32, #tpu.memory_space<vmem>>, vector<8x128xf32>,
    return
  }
  func.func @transform_0(%arg0: i32, %arg1: i32) -> (i32, i32, i32) {
    %c0_i32 = arith.constant 0 : i32
    %c0_i32_0 = arith.constant 0 : i32
    return %arg1, %arg0, %c0_i32 : i32, i32, i32
  }
  func.func @transform_1(%arg0: i32, %arg1: i32) -> (i32, i32) {
    %c0_i32 = arith.constant 0 : i32
    %c0_i32_0 = arith.constant 0 : i32
    return %arg0, %c0_i32 : i32, i32
  }
  func.func @transform_2(%arg0: i32, %arg1: i32) -> (i32, i32) {
    %c0_i32 = arith.constant 0 : i32
    %c0_i32_0 = arith.constant 0 : i32
    %c0_i32_1 = arith.constant 0 : i32
    return %c0_i32, %c0_i32_0 : i32, i32
  }
  func.func @transform_3(%arg0: i32, %arg1: i32) -> (i32, i32, i32) {
    %c0_i32 = arith.constant 0 : i32
    %c0_i32_0 = arith.constant 0 : i32
    return %arg1, %arg0, %c0_i32 : i32, i32, i32
  }
}

module attributes {stable_mosaic.version = 11 : i64} {
  func.func @_rnn_recurrent_kernel(%arg0: i32, %arg1: i32, %arg2: memref<8x8x128xf32, #tpu.memory_space<vmem>>, %arg3: memref<8x128xf32, #tpu.memory_space<vmem>>, %arg4: memref<128x128xf32, #tpu.memory_space<vmem>>, %arg5: memref<8x8x128xf32, #tpu.memory_space<vmem>>, %arg6: memref<8x128xf32, #tpu.memory_space<vmem>>) attributes {dimension_semantics = [#tpu.dimension_semantics<parallel>, #tpu.dimension_semantics<arbitrary>], iteration_bounds = array<i64: 1, 1>, scalar_prefetch = 0 : i64, scratch_operands = 1 : i64, tpu.core_type = #tpu.core_type<tc>, window_params = [{transform_indices = @transform_0, window_bounds = array<i64: 8, 8, 128>}, {transform_indices = @transform_1, window_bounds = array<i64: 8, 128>}, {pipeline_mode = #tpu.pipeline_mode<synchronous>, transform_indices = @transform_2, window_bounds = array<i64: 128, 128>}, {transform_indices = @transform_3, window_bounds = array<i64: 8, 8, 128>}]} {
    %c0_i32 = arith.constant 0 : i32
    %0 = arith.cmpi eq, %arg1, %c0_i32 : i32
    %1 = arith.extui %0 : i1 to i32
    %c0_i32_0 = arith.constant 0 : i32
    %2 = arith.cmpi ne, %1, %c0_i32_0 : i32
    scf.if %2 {
      %c0_46 = arith.constant 0 : index
      %c0_47 = arith.constant 0 : index
      %86 = vector.load %arg3[%c0_46, %c0_47] : memref<8x128xf32, #tpu.memory_space<vmem>>, vector<8x128xf32>
      %c0_48 = arith.constant 0 : index
      %c0_49 = arith.constant 0 : index
      %87 = vector.load %arg6[%c0_48, %c0_49] : memref<8x128xf32, #tpu.memory_space<vmem>>, vector<8x128xf32>
      tpu.vector_store %arg6[%c0_48, %c0_49], %86 {strides = array<i32>} : memref<8x128xf32, #tpu.memory_space<vmem>>, vector<8x128xf32>,
    } else {
    }
    %c0 = arith.constant 0 : index
    %c0_1 = arith.constant 0 : index
    %3 = vector.load %arg4[%c0, %c0_1] : memref<128x128xf32, #tpu.memory_space<vmem>>, vector<128x128xf32>
    %c0_2 = arith.constant 0 : index
    %c0_3 = arith.constant 0 : index
    %4 = vector.load %arg6[%c0_2, %c0_3] : memref<8x128xf32, #tpu.memory_space<vmem>>, vector<8x128xf32>
    %c0_i32_4 = arith.constant 0 : i32
    %5 = arith.index_cast %c0_i32_4 : i32 to index
    %c0_5 = arith.constant 0 : index
    %c0_6 = arith.constant 0 : index
    %6 = vector.load %arg2[%5, %c0_5, %c0_6] : memref<8x8x128xf32, #tpu.memory_space<vmem>>, vector<1x8x128xf32>
    %7 = vector.shape_cast %6 : vector<1x8x128xf32> to vector<8x128xf32>
    %cst = arith.constant dense<0.000000e+00> : vector<8x128xf32>
    %8 = tpu.matmul %4, %3, %cst {dimension_numbers = #tpu.dot_dimension_numbers<[1], [0], [0], [1], [0, 0, 1, 1], [], []>} : vector<8x128xf32>, vector<128x128xf32>, vector<8x128xf32> -> vector<8x128xf32>
    %9 = arith.addf %7, %8 : vector<8x128xf32>
    %10 = math.tanh %9 : vector<8x128xf32>
    %11 = arith.index_cast %c0_i32_4 : i32 to index
    %c0_7 = arith.constant 0 : index
    %c0_8 = arith.constant 0 : index
    %12 = vector.load %arg5[%11, %c0_7, %c0_8] : memref<8x8x128xf32, #tpu.memory_space<vmem>>, vector<1x8x128xf32>
    %13 = vector.shape_cast %12 : vector<1x8x128xf32> to vector<8x128xf32>
    %14 = vector.shape_cast %10 : vector<8x128xf32> to vector<1x8x128xf32>
    tpu.vector_store %arg5[%11, %c0_7, %c0_8], %14 {strides = array<i32>} : memref<8x8x128xf32, #tpu.memory_space<vmem>>, vector<1x8x128xf32>,
    %c1_i32 = arith.constant 1 : i32
    %15 = arith.index_cast %c1_i32 : i32 to index
    %c0_9 = arith.constant 0 : index
    %c0_10 = arith.constant 0 : index
    %16 = vector.load %arg2[%15, %c0_9, %c0_10] : memref<8x8x128xf32, #tpu.memory_space<vmem>>, vector<1x8x128xf32>
    %17 = vector.shape_cast %16 : vector<1x8x128xf32> to vector<8x128xf32>
    %cst_11 = arith.constant dense<0.000000e+00> : vector<8x128xf32>
    %18 = tpu.matmul %10, %3, %cst_11 {dimension_numbers = #tpu.dot_dimension_numbers<[1], [0], [0], [1], [0, 0, 1, 1], [], []>} : vector<8x128xf32>, vector<128x128xf32>, vector<8x128xf32> -> vector<8x128xf32>
    %19 = arith.addf %17, %18 : vector<8x128xf32>
    %20 = math.tanh %19 : vector<8x128xf32>
    %21 = arith.index_cast %c1_i32 : i32 to index
    %c0_12 = arith.constant 0 : index
    %c0_13 = arith.constant 0 : index
    %22 = vector.load %arg5[%21, %c0_12, %c0_13] : memref<8x8x128xf32, #tpu.memory_space<vmem>>, vector<1x8x128xf32>
    %23 = vector.shape_cast %22 : vector<1x8x128xf32> to vector<8x128xf32>
    %24 = vector.shape_cast %20 : vector<8x128xf32> to vector<1x8x128xf32>
    tpu.vector_store %arg5[%21, %c0_12, %c0_13], %24 {strides = array<i32>} : memref<8x8x128xf32, #tpu.memory_space<vmem>>, vector<1x8x128xf32>,
    %c2_i32 = arith.constant 2 : i32
    %25 = arith.index_cast %c2_i32 : i32 to index
    %c0_14 = arith.constant 0 : index
    %c0_15 = arith.constant 0 : index
    %26 = vector.load %arg2[%25, %c0_14, %c0_15] : memref<8x8x128xf32, #tpu.memory_space<vmem>>, vector<1x8x128xf32>
    %27 = vector.shape_cast %26 : vector<1x8x128xf32> to vector<8x128xf32>
    %cst_16 = arith.constant dense<0.000000e+00> : vector<8x128xf32>
    %28 = tpu.matmul %20, %3, %cst_16 {dimension_numbers = #tpu.dot_dimension_numbers<[1], [0], [0], [1], [0, 0, 1, 1], [], []>} : vector<8x128xf32>, vector<128x128xf32>, vector<8x128xf32> -> vector<8x128xf32>
    %29 = arith.addf %27, %28 : vector<8x128xf32>
    %30 = math.tanh %29 : vector<8x128xf32>
    %31 = arith.index_cast %c2_i32 : i32 to index
    %c0_17 = arith.constant 0 : index
    %c0_18 = arith.constant 0 : index
    %32 = vector.load %arg5[%31, %c0_17, %c0_18] : memref<8x8x128xf32, #tpu.memory_space<vmem>>, vector<1x8x128xf32>
    %33 = vector.shape_cast %32 : vector<1x8x128xf32> to vector<8x128xf32>
    %34 = vector.shape_cast %30 : vector<8x128xf32> to vector<1x8x128xf32>
    tpu.vector_store %arg5[%31, %c0_17, %c0_18], %34 {strides = array<i32>} : memref<8x8x128xf32, #tpu.memory_space<vmem>>, vector<1x8x128xf32>,
    %c3_i32 = arith.constant 3 : i32
    %35 = arith.index_cast %c3_i32 : i32 to index
    %c0_19 = arith.constant 0 : index
    %c0_20 = arith.constant 0 : index
    %36 = vector.load %arg2[%35, %c0_19, %c0_20] : memref<8x8x128xf32, #tpu.memory_space<vmem>>, vector<1x8x128xf32>
    %37 = vector.shape_cast %36 : vector<1x8x128xf32> to vector<8x128xf32>
    %cst_21 = arith.constant dense<0.000000e+00> : vector<8x128xf32>
    %38 = tpu.matmul %30, %3, %cst_21 {dimension_numbers = #tpu.dot_dimension_numbers<[1], [0], [0], [1], [0, 0, 1, 1], [], []>} : vector<8x128xf32>, vector<128x128xf32>, vector<8x128xf32> -> vector<8x128xf32>
    %39 = arith.addf %37, %38 : vector<8x128xf32>
    %40 = math.tanh %39 : vector<8x128xf32>
    %41 = arith.index_cast %c3_i32 : i32 to index
    %c0_22 = arith.constant 0 : index
    %c0_23 = arith.constant 0 : index
    %42 = vector.load %arg5[%41, %c0_22, %c0_23] : memref<8x8x128xf32, #tpu.memory_space<vmem>>, vector<1x8x128xf32>
    %43 = vector.shape_cast %42 : vector<1x8x128xf32> to vector<8x128xf32>
    %44 = vector.shape_cast %40 : vector<8x128xf32> to vector<1x8x128xf32>
    tpu.vector_store %arg5[%41, %c0_22, %c0_23], %44 {strides = array<i32>} : memref<8x8x128xf32, #tpu.memory_space<vmem>>, vector<1x8x128xf32>,
    %c4_i32 = arith.constant 4 : i32
    %45 = arith.index_cast %c4_i32 : i32 to index
    %c0_24 = arith.constant 0 : index
    %c0_25 = arith.constant 0 : index
    %46 = vector.load %arg2[%45, %c0_24, %c0_25] : memref<8x8x128xf32, #tpu.memory_space<vmem>>, vector<1x8x128xf32>
    %47 = vector.shape_cast %46 : vector<1x8x128xf32> to vector<8x128xf32>
    %cst_26 = arith.constant dense<0.000000e+00> : vector<8x128xf32>
    %48 = tpu.matmul %40, %3, %cst_26 {dimension_numbers = #tpu.dot_dimension_numbers<[1], [0], [0], [1], [0, 0, 1, 1], [], []>} : vector<8x128xf32>, vector<128x128xf32>, vector<8x128xf32> -> vector<8x128xf32>
    %49 = arith.addf %47, %48 : vector<8x128xf32>
    %50 = math.tanh %49 : vector<8x128xf32>
    %51 = arith.index_cast %c4_i32 : i32 to index
    %c0_27 = arith.constant 0 : index
    %c0_28 = arith.constant 0 : index
    %52 = vector.load %arg5[%51, %c0_27, %c0_28] : memref<8x8x128xf32, #tpu.memory_space<vmem>>, vector<1x8x128xf32>
    %53 = vector.shape_cast %52 : vector<1x8x128xf32> to vector<8x128xf32>
    %54 = vector.shape_cast %50 : vector<8x128xf32> to vector<1x8x128xf32>
    tpu.vector_store %arg5[%51, %c0_27, %c0_28], %54 {strides = array<i32>} : memref<8x8x128xf32, #tpu.memory_space<vmem>>, vector<1x8x128xf32>,
    %c5_i32 = arith.constant 5 : i32
    %55 = arith.index_cast %c5_i32 : i32 to index
    %c0_29 = arith.constant 0 : index
    %c0_30 = arith.constant 0 : index
    %56 = vector.load %arg2[%55, %c0_29, %c0_30] : memref<8x8x128xf32, #tpu.memory_space<vmem>>, vector<1x8x128xf32>
    %57 = vector.shape_cast %56 : vector<1x8x128xf32> to vector<8x128xf32>
    %cst_31 = arith.constant dense<0.000000e+00> : vector<8x128xf32>
    %58 = tpu.matmul %50, %3, %cst_31 {dimension_numbers = #tpu.dot_dimension_numbers<[1], [0], [0], [1], [0, 0, 1, 1], [], []>} : vector<8x128xf32>, vector<128x128xf32>, vector<8x128xf32> -> vector<8x128xf32>
    %59 = arith.addf %57, %58 : vector<8x128xf32>
    %60 = math.tanh %59 : vector<8x128xf32>
    %61 = arith.index_cast %c5_i32 : i32 to index
    %c0_32 = arith.constant 0 : index
    %c0_33 = arith.constant 0 : index
    %62 = vector.load %arg5[%61, %c0_32, %c0_33] : memref<8x8x128xf32, #tpu.memory_space<vmem>>, vector<1x8x128xf32>
    %63 = vector.shape_cast %62 : vector<1x8x128xf32> to vector<8x128xf32>
    %64 = vector.shape_cast %60 : vector<8x128xf32> to vector<1x8x128xf32>
    tpu.vector_store %arg5[%61, %c0_32, %c0_33], %64 {strides = array<i32>} : memref<8x8x128xf32, #tpu.memory_space<vmem>>, vector<1x8x128xf32>,
    %c6_i32 = arith.constant 6 : i32
    %65 = arith.index_cast %c6_i32 : i32 to index
    %c0_34 = arith.constant 0 : index
    %c0_35 = arith.constant 0 : index
    %66 = vector.load %arg2[%65, %c0_34, %c0_35] : memref<8x8x128xf32, #tpu.memory_space<vmem>>, vector<1x8x128xf32>
    %67 = vector.shape_cast %66 : vector<1x8x128xf32> to vector<8x128xf32>
    %cst_36 = arith.constant dense<0.000000e+00> : vector<8x128xf32>
    %68 = tpu.matmul %60, %3, %cst_36 {dimension_numbers = #tpu.dot_dimension_numbers<[1], [0], [0], [1], [0, 0, 1, 1], [], []>} : vector<8x128xf32>, vector<128x128xf32>, vector<8x128xf32> -> vector<8x128xf32>
    %69 = arith.addf %67, %68 : vector<8x128xf32>
    %70 = math.tanh %69 : vector<8x128xf32>
    %71 = arith.index_cast %c6_i32 : i32 to index
    %c0_37 = arith.constant 0 : index
    %c0_38 = arith.constant 0 : index
    %72 = vector.load %arg5[%71, %c0_37, %c0_38] : memref<8x8x128xf32, #tpu.memory_space<vmem>>, vector<1x8x128xf32>
    %73 = vector.shape_cast %72 : vector<1x8x128xf32> to vector<8x128xf32>
    %74 = vector.shape_cast %70 : vector<8x128xf32> to vector<1x8x128xf32>
    tpu.vector_store %arg5[%71, %c0_37, %c0_38], %74 {strides = array<i32>} : memref<8x8x128xf32, #tpu.memory_space<vmem>>, vector<1x8x128xf32>,
    %c7_i32 = arith.constant 7 : i32
    %75 = arith.index_cast %c7_i32 : i32 to index
    %c0_39 = arith.constant 0 : index
    %c0_40 = arith.constant 0 : index
    %76 = vector.load %arg2[%75, %c0_39, %c0_40] : memref<8x8x128xf32, #tpu.memory_space<vmem>>, vector<1x8x128xf32>
    %77 = vector.shape_cast %76 : vector<1x8x128xf32> to vector<8x128xf32>
    %cst_41 = arith.constant dense<0.000000e+00> : vector<8x128xf32>
    %78 = tpu.matmul %70, %3, %cst_41 {dimension_numbers = #tpu.dot_dimension_numbers<[1], [0], [0], [1], [0, 0, 1, 1], [], []>} : vector<8x128xf32>, vector<128x128xf32>, vector<8x128xf32> -> vector<8x128xf32>
    %79 = arith.addf %77, %78 : vector<8x128xf32>
    %80 = math.tanh %79 : vector<8x128xf32>
    %81 = arith.index_cast %c7_i32 : i32 to index
    %c0_42 = arith.constant 0 : index
    %c0_43 = arith.constant 0 : index
    %82 = vector.load %arg5[%81, %c0_42, %c0_43] : memref<8x8x128xf32, #tpu.memory_space<vmem>>, vector<1x8x128xf32>
    %83 = vector.shape_cast %82 : vector<1x8x128xf32> to vector<8x128xf32>
    %84 = vector.shape_cast %80 : vector<8x128xf32> to vector<1x8x128xf32>
    tpu.vector_store %arg5[%81, %c0_42, %c0_43], %84 {strides = array<i32>} : memref<8x8x128xf32, #tpu.memory_space<vmem>>, vector<1x8x128xf32>,
    %c8_i32 = arith.constant 8 : i32
    %c0_44 = arith.constant 0 : index
    %c0_45 = arith.constant 0 : index
    %85 = vector.load %arg6[%c0_44, %c0_45] : memref<8x128xf32, #tpu.memory_space<vmem>>, vector<8x128xf32>
    tpu.vector_store %arg6[%c0_44, %c0_45], %80 {strides = array<i32>} : memref<8x128xf32, #tpu.memory_space<vmem>>, vector<8x128xf32>,
    return
  }
  func.func @transform_0(%arg0: i32, %arg1: i32) -> (i32, i32, i32) {
    %c0_i32 = arith.constant 0 : i32
    %c0_i32_0 = arith.constant 0 : i32
    return %arg1, %arg0, %c0_i32 : i32, i32, i32
  }
  func.func @transform_1(%arg0: i32, %arg1: i32) -> (i32, i32) {
    %c0_i32 = arith.constant 0 : i32
    %c0_i32_0 = arith.constant 0 : i32
    return %arg0, %c0_i32 : i32, i32
  }
  func.func @transform_2(%arg0: i32, %arg1: i32) -> (i32, i32) {
    %c0_i32 = arith.constant 0 : i32
    %c0_i32_0 = arith.constant 0 : i32
    %c0_i32_1 = arith.constant 0 : i32
    return %c0_i32, %c0_i32_0 : i32, i32
  }
  func.func @transform_3(%arg0: i32, %arg1: i32) -> (i32, i32, i32) {
    %c0_i32 = arith.constant 0 : i32
    %c0_i32_0 = arith.constant 0 : i32
    return %arg1, %arg0, %c0_i32 : i32, i32, i32
  }
}

</mosaic_0001>

<llo_original>
// kernel: tpu_custom_call.1
$region0: #{tpu_custom_call.1}
  #allocation0 [shape = 'u32[]', space=smem, size = 0x4, offset = 0x4, fixed_abs, tag = 'smem constant byte address 0x4 - core index']
  #allocation1 [shape = 'u32[144,128]{1,0:T(1,128)}', space=vmem, size = 0x12000, scoped, tag = 'internal scratch']
  #allocation2 [shape = 'f32[8,128]{1,0:T(8,128)}', space=vmem, size = 0x1000, scoped, tag = 'scratch operand']
  %s0 = inlined_call_operand.hbm [shape: f32[8,8,128], index: 0, kind: input, shape index: {}]
  %s1 = inlined_call_operand.hbm [shape: f32[8,128], index: 1, kind: input, shape index: {}]
  %s2 = inlined_call_operand.hbm [shape: f32[128,128], index: 2, kind: input, shape index: {}]
  %s3 = inlined_call_operand.hbm [shape: f32[8,8,128], index: 3, kind: output, shape index: {}]
  %s4 = sld [smem:[#allocation0]]
  $region38: #{tpu_custom_call.1} parent=0
    _
  %s6 = ssub.s32 1, %s4
  %s7 = scalar_select 0, %s6, %s4
  $region1: #{tpu_custom_call.1} parent=0
    #allocation3 [shape = 'u8[32768]{0}', space=vmem, size = 0x8000, scoped, tag = 'input window, operand 0, single buffered']
    #allocation4 [shape = 's32[1]{0}', space=sflag, size = 0x4, scoped, tag = 'scoped memory for tpu_custom_call.1']
    #allocation5 [shape = 's32[1]{0}', space=sflag, size = 0x4, scoped, tag = 'scoped memory for tpu_custom_call.1']
    #allocation6 [shape = 'u8[4096]{0}', space=vmem, size = 0x1000, scoped, tag = 'input window, operand 1, single buffered']
    #allocation7 [shape = 's32[1]{0}', space=sflag, size = 0x4, scoped, tag = 'scoped memory for tpu_custom_call.1']
    #allocation8 [shape = 'u8[65536]{0}', space=vmem, size = 0x10000, scoped, tag = 'input window, operand 2, single buffered']
    #allocation9 [shape = 'u8[32768]{0}', space=vmem, size = 0x8000, scoped, tag = 'output window, operand 0, single buffered']
    %8 = vsyncpa [#allocation4], 0
    %9 = vsyncpa [#allocation7], 0
    %10 = vsyncpa [#allocation5], 0
    // Predicated region
    $region2: #{tpu_custom_call.1} parent=1 // pred_check
      _
    $region3: #{tpu_custom_call.1} parent=1 // pred_check_branch
      %12 = sbr.rel (0) target = $region5
    $region4: #{tpu_custom_call.1} parent=1 // pred_region
      %s14 = ssub.s32 1024, 1024
      %15 = vsyncadd [#allocation4], %s14
      %s16 = sshll.u32 [#allocation3], 4
      %s17 = int_to_ptr.vmem [resolvable:$true] %s16
      %22 = dma.hbm_to_vmem [thread:$0]  %s0, 1024, %s17, [#allocation4], 128, 128, 8
    $region5: #{tpu_custom_call.1} parent=1 // pred_fallthru
      _
    // Predicated region
    $region6: #{tpu_custom_call.1} parent=1 // pred_check
      _
    $region7: #{tpu_custom_call.1} parent=1 // pred_check_branch
      %24 = sbr.rel (0) target = $region9
    $region8: #{tpu_custom_call.1} parent=1 // pred_region
      %s26 = ssub.s32 128, 128
      %27 = vsyncadd [#allocation7], %s26
      %s29 = sshll.u32 [#allocation6], 4
      %s30 = int_to_ptr.vmem [resolvable:$true] %s29
      %32 = dma.hbm_to_vmem [thread:$0]  %s1, 128, %s30, [#allocation7]
    $region9: #{tpu_custom_call.1} parent=1 // pred_fallthru
      _
    // Predicated region
    $region10: #{tpu_custom_call.1} parent=1 // pred_check
      _
    $region11: #{tpu_custom_call.1} parent=1 // pred_check_branch
      %34 = sbr.rel (0) target = $region13
    $region12: #{tpu_custom_call.1} parent=1 // pred_region
      %s36 = ssub.s32 2048, 2048
      %37 = vsyncadd [#allocation7], %s36
      %s38 = sshll.u32 [#allocation8], 4
      %s39 = int_to_ptr.vmem [resolvable:$true] %s38
      %44 = dma.hbm_to_vmem [thread:$0]  %s2, 2048, %s39, [#allocation7], 128, 128, 8
    $region13: #{tpu_custom_call.1} parent=1 // pred_fallthru
      _
    // Predicated region
    $region14: #{tpu_custom_call.1} parent=1 // pred_check
      _
    $region15: #{tpu_custom_call.1} parent=1 // pred_check_branch
      %46 = sbr.rel (0) target = $region17
    $region16: #{tpu_custom_call.1} parent=1 // pred_region
      %47 = dma.done [#allocation4], 1024
    $region17: #{tpu_custom_call.1} parent=1 // pred_fallthru
      _
    // Predicated region
    $region18: #{tpu_custom_call.1} parent=1 // pred_check
      _
    $region19: #{tpu_custom_call.1} parent=1 // pred_check_branch
      %49 = sbr.rel (0) target = $region21
    $region20: #{tpu_custom_call.1} parent=1 // pred_region
      %50 = dma.done [#allocation7], 128
    $region21: #{tpu_custom_call.1} parent=1 // pred_fallthru
      _
    // Predicated region
    $region22: #{tpu_custom_call.1} parent=1 // pred_check
      _
    $region23: #{tpu_custom_call.1} parent=1 // pred_check_branch
      %52 = sbr.rel (0) target = $region25
    $region24: #{tpu_custom_call.1} parent=1 // pred_region
      %53 = dma.done [#allocation7], 2048
    $region25: #{tpu_custom_call.1} parent=1 // pred_fallthru
      _
    %p54 = scmp.eq.s32.totalorder 0, 0
    // Predicated region
    $region26: #{tpu_custom_call.1} parent=1 // pred_check
      %p55 = pneg %p54
    $region27: #{tpu_custom_call.1} parent=1 // pred_check_branch
      %57 = sbr.rel (%p55) target = $region29
    $region28: #{tpu_custom_call.1} parent=1 // pred_region
      %v58 = vld [vmem:[#allocation6] sm:$0xff]
      %59 = vst [vmem:[#allocation2] sm:$0xff] %v58
    $region29: #{tpu_custom_call.1} parent=1 // pred_fallthru
      _
    %v60 = vld [vmem:[#allocation8] sm:$0xff]
    %v61 = vld [vmem:[#allocation8 + $0x8] sm:$0xff]
    %v62 = vld [vmem:[#allocation8 + $0x10] sm:$0xff]
    %v63 = vld [vmem:[#allocation8 + $0x18] sm:$0xff]
    %v64 = vld [vmem:[#allocation8 + $0x20] sm:$0xff]
    %v65 = vld [vmem:[#allocation8 + $0x28] sm:$0xff]
    %v66 = vld [vmem:[#allocation8 + $0x30] sm:$0xff]
    %v67 = vld [vmem:[#allocation8 + $0x38] sm:$0xff]
    %v68 = vld [vmem:[#allocation8 + $0x40] sm:$0xff]
    %v69 = vld [vmem:[#allocation8 + $0x48] sm:$0xff]
    %v70 = vld [vmem:[#allocation8 + $0x50] sm:$0xff]
    %v71 = vld [vmem:[#allocation8 + $0x58] sm:$0xff]
    %v72 = vld [vmem:[#allocation8 + $0x60] sm:$0xff]
    %v73 = vld [vmem:[#allocation8 + $0x68] sm:$0xff]
    %v74 = vld [vmem:[#allocation8 + $0x70] sm:$0xff]
    %v75 = vld [vmem:[#allocation8 + $0x78] sm:$0xff]
    %v76 = vld [vmem:[#allocation2] sm:$0xff]
    %v77 = vld [vmem:[#allocation3] sm:$0xff]
    %78 = vmatprep.subr.mxu0 0.0
    %79 = vmatpush1.msra.mxu0 %v75
    %80 = vmatprep.subr.mxu0 0.0
    %81 = vmatpush1.msra.mxu0 %v74
    %82 = vmatprep.subr.mxu0 0.0
    %83 = vmatpush1.msra.mxu0 %v73
    %84 = vmatprep.subr.mxu0 0.0
    %85 = vmatpush1.msra.mxu0 %v72
    %86 = vmatprep.subr.mxu0 0.0
    %87 = vmatpush1.msra.mxu0 %v71
    %88 = vmatprep.subr.mxu0 0.0
    %89 = vmatpush1.msra.mxu0 %v70
    %90 = vmatprep.subr.mxu0 0.0
    %91 = vmatpush1.msra.mxu0 %v69
    %92 = vmatprep.subr.mxu0 0.0
    %93 = vmatpush1.msra.mxu0 %v68
    %94 = vmatprep.subr.mxu0 0.0
    %95 = vmatpush1.msra.mxu0 %v67
    %96 = vmatprep.subr.mxu0 0.0
    %97 = vmatpush1.msra.mxu0 %v66
    %98 = vmatprep.subr.mxu0 0.0
    %99 = vmatpush1.msra.mxu0 %v65
    %100 = vmatprep.subr.mxu0 0.0
    %101 = vmatpush1.msra.mxu0 %v64
    %102 = vmatprep.subr.mxu0 0.0
    %103 = vmatpush1.msra.mxu0 %v63
    %104 = vmatprep.subr.mxu0 0.0
    %105 = vmatpush1.msra.mxu0 %v62
    %106 = vmatprep.subr.mxu0 0.0
    %107 = vmatpush1.msra.mxu0 %v61
    %108 = vmatprep.subr.mxu0 0.0
    %109 = vmatpush1.msra.mxu0 %v60
    %110 = vmatprep.subr.mxu0 0.0
    %111 = vmatpush2.msra.mxu0 0.0
    %112 = vmatprep.subr.mxu0 0.0
    %113 = vmatpush2.msra.mxu0 0.0
    %114 = vmatprep.subr.mxu0 0.0
    %115 = vmatpush2.msra.mxu0 0.0
    %116 = vmatprep.subr.mxu0 0.0
    %117 = vmatpush2.msra.mxu0 0.0
    %118 = vmatprep.subr.mxu0 0.0
    %119 = vmatpush2.msra.mxu0 0.0
    %120 = vmatprep.subr.mxu0 0.0
    %121 = vmatpush2.msra.mxu0 0.0
    %122 = vmatprep.subr.mxu0 0.0
    %123 = vmatpush2.msra.mxu0 0.0
    %124 = vmatprep.subr.mxu0 0.0
    %125 = vmatpush2.msra.mxu0 0.0
    %126 = vmatprep.subr.mxu0 0.0
    %127 = vmatpush2.msra.mxu0 0.0
    %128 = vmatprep.subr.mxu0 0.0
    %129 = vmatpush2.msra.mxu0 0.0
    %130 = vmatprep.subr.mxu0 0.0
    %131 = vmatpush2.msra.mxu0 0.0
    %132 = vmatprep.subr.mxu0 0.0
    %133 = vmatpush2.msra.mxu0 0.0
    %134 = vmatprep.subr.mxu0 0.0
    %135 = vmatpush2.msra.mxu0 0.0
    %136 = vmatprep.subr.mxu0 0.0
    %137 = vmatpush2.msra.mxu0 0.0
    %138 = vmatprep.subr.mxu0 0.0
    %139 = vmatpush2.msra.mxu0 0.0
    %140 = vmatprep.subr.mxu0 0.0
    %141 = vmatpush2.msra.mxu0 0.0
    %142 = vmatprep.mubr.f32.mxu0 0.0
    %143 = vmatmul.mubr.f32.gmra.mxu0 %v76
    %v144 = vpop.f32.mrf.mxu0
    %v145 = vadd.f32 0.0, %v144
    %v146 = vpop.f32.mrf.mxu0
    %147 = vdwg.mxu0
    %v148 = vadd.f32 %v77, %v145
    %v149 = vtanh.pop %v148
    %150 = vst [vmem:[#allocation9] sm:$0xff] %v149
    %s151 = scalar_lea.vmem [#allocation3], 8
    %v152 = vld [vmem:[%s151] sm:$0xff]
    %153 = vmatprep.subr.mxu0 0.0
    %154 = vmatpush1.msra.mxu0 %v75
    %155 = vmatprep.subr.mxu0 0.0
    %156 = vmatpush1.msra.mxu0 %v74
    %157 = vmatprep.subr.mxu0 0.0
    %158 = vmatpush1.msra.mxu0 %v73
    %159 = vmatprep.subr.mxu0 0.0
    %160 = vmatpush1.msra.mxu0 %v72
    %161 = vmatprep.subr.mxu0 0.0
    %162 = vmatpush1.msra.mxu0 %v71
    %163 = vmatprep.subr.mxu0 0.0
    %164 = vmatpush1.msra.mxu0 %v70
    %165 = vmatprep.subr.mxu0 0.0
    %166 = vmatpush1.msra.mxu0 %v69
    %167 = vmatprep.subr.mxu0 0.0
    %168 = vmatpush1.msra.mxu0 %v68
    %169 = vmatprep.subr.mxu0 0.0
    %170 = vmatpush1.msra.mxu0 %v67
    %171 = vmatprep.subr.mxu0 0.0
    %172 = vmatpush1.msra.mxu0 %v66
    %173 = vmatprep.subr.mxu0 0.0
    %174 = vmatpush1.msra.mxu0 %v65
    %175 = vmatprep.subr.mxu0 0.0
    %176 = vmatpush1.msra.mxu0 %v64
    %177 = vmatprep.subr.mxu0 0.0
    %178 = vmatpush1.msra.mxu0 %v63
    %179 = vmatprep.subr.mxu0 0.0
    %180 = vmatpush1.msra.mxu0 %v62
    %181 = vmatprep.subr.mxu0 0.0
    %182 = vmatpush1.msra.mxu0 %v61
    %183 = vmatprep.subr.mxu0 0.0
    %184 = vmatpush1.msra.mxu0 %v60
    %185 = vmatprep.subr.mxu0 0.0
    %186 = vmatpush2.msra.mxu0 0.0
    %187 = vmatprep.subr.mxu0 0.0
    %188 = vmatpush2.msra.mxu0 0.0
    %189 = vmatprep.subr.mxu0 0.0
    %190 = vmatpush2.msra.mxu0 0.0
    %191 = vmatprep.subr.mxu0 0.0
    %192 = vmatpush2.msra.mxu0 0.0
    %193 = vmatprep.subr.mxu0 0.0
    %194 = vmatpush2.msra.mxu0 0.0
    %195 = vmatprep.subr.mxu0 0.0
    %196 = vmatpush2.msra.mxu0 0.0
    %197 = vmatprep.subr.mxu0 0.0
    %198 = vmatpush2.msra.mxu0 0.0
    %199 = vmatprep.subr.mxu0 0.0
    %200 = vmatpush2.msra.mxu0 0.0
    %201 = vmatprep.subr.mxu0 0.0
    %202 = vmatpush2.msra.mxu0 0.0
    %203 = vmatprep.subr.mxu0 0.0
    %204 = vmatpush2.msra.mxu0 0.0
    %205 = vmatprep.subr.mxu0 0.0
    %206 = vmatpush2.msra.mxu0 0.0
    %207 = vmatprep.subr.mxu0 0.0
    %208 = vmatpush2.msra.mxu0 0.0
    %209 = vmatprep.subr.mxu0 0.0
    %210 = vmatpush2.msra.mxu0 0.0
    %211 = vmatprep.subr.mxu0 0.0
    %212 = vmatpush2.msra.mxu0 0.0
    %213 = vmatprep.subr.mxu0 0.0
    %214 = vmatpush2.msra.mxu0 0.0
    %215 = vmatprep.subr.mxu0 0.0
    %216 = vmatpush2.msra.mxu0 0.0
    %217 = vmatprep.mubr.f32.mxu0 0.0
    %218 = vmatmul.mubr.f32.gmra.mxu0 %v149
    %v219 = vpop.f32.mrf.mxu0
    %v220 = vadd.f32 0.0, %v219
    %v221 = vpop.f32.mrf.mxu0
    %222 = vdwg.mxu0
    %v223 = vadd.f32 %v152, %v220
    %v224 = vtanh.pop %v223
    %s225 = scalar_lea.vmem [#allocation9], 8
    %226 = vst [vmem:[%s225] sm:$0xff] %v224
    %s227 = scalar_lea.vmem [#allocation3], 16
    %v228 = vld [vmem:[%s227] sm:$0xff]
    %229 = vmatprep.subr.mxu0 0.0
    %230 = vmatpush1.msra.mxu0 %v75
    %231 = vmatprep.subr.mxu0 0.0
    %232 = vmatpush1.msra.mxu0 %v74
    %233 = vmatprep.subr.mxu0 0.0
    %234 = vmatpush1.msra.mxu0 %v73
    %235 = vmatprep.subr.mxu0 0.0
    %236 = vmatpush1.msra.mxu0 %v72
    %237 = vmatprep.subr.mxu0 0.0
    %238 = vmatpush1.msra.mxu0 %v71
    %239 = vmatprep.subr.mxu0 0.0
    %240 = vmatpush1.msra.mxu0 %v70
    %241 = vmatprep.subr.mxu0 0.0
    %242 = vmatpush1.msra.mxu0 %v69
    %243 = vmatprep.subr.mxu0 0.0
    %244 = vmatpush1.msra.mxu0 %v68
    %245 = vmatprep.subr.mxu0 0.0
    %246 = vmatpush1.msra.mxu0 %v67
    %247 = vmatprep.subr.mxu0 0.0
    %248 = vmatpush1.msra.mxu0 %v66
    %249 = vmatprep.subr.mxu0 0.0
    %250 = vmatpush1.msra.mxu0 %v65
    %251 = vmatprep.subr.mxu0 0.0
    %252 = vmatpush1.msra.mxu0 %v64
    %253 = vmatprep.subr.mxu0 0.0
    %254 = vmatpush1.msra.mxu0 %v63
    %255 = vmatprep.subr.mxu0 0.0
    %256 = vmatpush1.msra.mxu0 %v62
    %257 = vmatprep.subr.mxu0 0.0
    %258 = vmatpush1.msra.mxu0 %v61
    %259 = vmatprep.subr.mxu0 0.0
    %260 = vmatpush1.msra.mxu0 %v60
    %261 = vmatprep.subr.mxu0 0.0
    %262 = vmatpush2.msra.mxu0 0.0
    %263 = vmatprep.subr.mxu0 0.0
    %264 = vmatpush2.msra.mxu0 0.0
    %265 = vmatprep.subr.mxu0 0.0
    %266 = vmatpush2.msra.mxu0 0.0
    %267 = vmatprep.subr.mxu0 0.0
    %268 = vmatpush2.msra.mxu0 0.0
    %269 = vmatprep.subr.mxu0 0.0
    %270 = vmatpush2.msra.mxu0 0.0
    %271 = vmatprep.subr.mxu0 0.0
    %272 = vmatpush2.msra.mxu0 0.0
    %273 = vmatprep.subr.mxu0 0.0
    %274 = vmatpush2.msra.mxu0 0.0
    %275 = vmatprep.subr.mxu0 0.0
    %276 = vmatpush2.msra.mxu0 0.0
    %277 = vmatprep.subr.mxu0 0.0
    %278 = vmatpush2.msra.mxu0 0.0
    %279 = vmatprep.subr.mxu0 0.0
    %280 = vmatpush2.msra.mxu0 0.0
    %281 = vmatprep.subr.mxu0 0.0
    %282 = vmatpush2.msra.mxu0 0.0
    %283 = vmatprep.subr.mxu0 0.0
    %284 = vmatpush2.msra.mxu0 0.0
    %285 = vmatprep.subr.mxu0 0.0
    %286 = vmatpush2.msra.mxu0 0.0
    %287 = vmatprep.subr.mxu0 0.0
    %288 = vmatpush2.msra.mxu0 0.0
    %289 = vmatprep.subr.mxu0 0.0
    %290 = vmatpush2.msra.mxu0 0.0
    %291 = vmatprep.subr.mxu0 0.0
    %292 = vmatpush2.msra.mxu0 0.0
    %293 = vmatprep.mubr.f32.mxu0 0.0
    %294 = vmatmul.mubr.f32.gmra.mxu0 %v224
    %v295 = vpop.f32.mrf.mxu0
    %v296 = vadd.f32 0.0, %v295
    %v297 = vpop.f32.mrf.mxu0
    %298 = vdwg.mxu0
    %v299 = vadd.f32 %v228, %v296
    %v300 = vtanh.pop %v299
    %s301 = scalar_lea.vmem [#allocation9], 16
    %302 = vst [vmem:[%s301] sm:$0xff] %v300
    %s303 = scalar_lea.vmem [#allocation3], 24
    %v304 = vld [vmem:[%s303] sm:$0xff]
    %305 = vmatprep.subr.mxu0 0.0
    %306 = vmatpush1.msra.mxu0 %v75
    %307 = vmatprep.subr.mxu0 0.0
    %308 = vmatpush1.msra.mxu0 %v74
    %309 = vmatprep.subr.mxu0 0.0
    %310 = vmatpush1.msra.mxu0 %v73
    %311 = vmatprep.subr.mxu0 0.0
    %312 = vmatpush1.msra.mxu0 %v72
    %313 = vmatprep.subr.mxu0 0.0
    %314 = vmatpush1.msra.mxu0 %v71
    %315 = vmatprep.subr.mxu0 0.0
    %316 = vmatpush1.msra.mxu0 %v70
    %317 = vmatprep.subr.mxu0 0.0
    %318 = vmatpush1.msra.mxu0 %v69
    %319 = vmatprep.subr.mxu0 0.0
    %320 = vmatpush1.msra.mxu0 %v68
    %321 = vmatprep.subr.mxu0 0.0
    %322 = vmatpush1.msra.mxu0 %v67
    %323 = vmatprep.subr.mxu0 0.0
    %324 = vmatpush1.msra.mxu0 %v66
    %325 = vmatprep.subr.mxu0 0.0
    %326 = vmatpush1.msra.mxu0 %v65
    %327 = vmatprep.subr.mxu0 0.0
    %328 = vmatpush1.msra.mxu0 %v64
    %329 = vmatprep.subr.mxu0 0.0
    %330 = vmatpush1.msra.mxu0 %v63
    %331 = vmatprep.subr.mxu0 0.0
    %332 = vmatpush1.msra.mxu0 %v62
    %333 = vmatprep.subr.mxu0 0.0
    %334 = vmatpush1.msra.mxu0 %v61
    %335 = vmatprep.subr.mxu0 0.0
    %336 = vmatpush1.msra.mxu0 %v60
    %337 = vmatprep.subr.mxu0 0.0
    %338 = vmatpush2.msra.mxu0 0.0
    %339 = vmatprep.subr.mxu0 0.0
    %340 = vmatpush2.msra.mxu0 0.0
    %341 = vmatprep.subr.mxu0 0.0
    %342 = vmatpush2.msra.mxu0 0.0
    %343 = vmatprep.subr.mxu0 0.0
    %344 = vmatpush2.msra.mxu0 0.0
    %345 = vmatprep.subr.mxu0 0.0
    %346 = vmatpush2.msra.mxu0 0.0
    %347 = vmatprep.subr.mxu0 0.0
    %348 = vmatpush2.msra.mxu0 0.0
    %349 = vmatprep.subr.mxu0 0.0
    %350 = vmatpush2.msra.mxu0 0.0
    %351 = vmatprep.subr.mxu0 0.0
    %352 = vmatpush2.msra.mxu0 0.0
    %353 = vmatprep.subr.mxu0 0.0
    %354 = vmatpush2.msra.mxu0 0.0
    %355 = vmatprep.subr.mxu0 0.0
    %356 = vmatpush2.msra.mxu0 0.0
    %357 = vmatprep.subr.mxu0 0.0
    %358 = vmatpush2.msra.mxu0 0.0
    %359 = vmatprep.subr.mxu0 0.0
    %360 = vmatpush2.msra.mxu0 0.0
    %361 = vmatprep.subr.mxu0 0.0
    %362 = vmatpush2.msra.mxu0 0.0
    %363 = vmatprep.subr.mxu0 0.0
    %364 = vmatpush2.msra.mxu0 0.0
    %365 = vmatprep.subr.mxu0 0.0
    %366 = vmatpush2.msra.mxu0 0.0
    %367 = vmatprep.subr.mxu0 0.0
    %368 = vmatpush2.msra.mxu0 0.0
    %369 = vmatprep.mubr.f32.mxu0 0.0
    %370 = vmatmul.mubr.f32.gmra.mxu0 %v300
    %v371 = vpop.f32.mrf.mxu0
    %v372 = vadd.f32 0.0, %v371
    %v373 = vpop.f32.mrf.mxu0
    %374 = vdwg.mxu0
    %v375 = vadd.f32 %v304, %v372
    %v376 = vtanh.pop %v375
    %s377 = scalar_lea.vmem [#allocation9], 24
    %378 = vst [vmem:[%s377] sm:$0xff] %v376
    %s379 = scalar_lea.vmem [#allocation3], 32
    %v380 = vld [vmem:[%s379] sm:$0xff]
    %381 = vmatprep.subr.mxu0 0.0
    %382 = vmatpush1.msra.mxu0 %v75
    %383 = vmatprep.subr.mxu0 0.0
    %384 = vmatpush1.msra.mxu0 %v74
    %385 = vmatprep.subr.mxu0 0.0
    %386 = vmatpush1.msra.mxu0 %v73
    %387 = vmatprep.subr.mxu0 0.0
    %388 = vmatpush1.msra.mxu0 %v72
    %389 = vmatprep.subr.mxu0 0.0
    %390 = vmatpush1.msra.mxu0 %v71
    %391 = vmatprep.subr.mxu0 0.0
    %392 = vmatpush1.msra.mxu0 %v70
    %393 = vmatprep.subr.mxu0 0.0
    %394 = vmatpush1.msra.mxu0 %v69
    %395 = vmatprep.subr.mxu0 0.0
    %396 = vmatpush1.msra.mxu0 %v68
    %397 = vmatprep.subr.mxu0 0.0
    %398 = vmatpush1.msra.mxu0 %v67
    %399 = vmatprep.subr.mxu0 0.0
    %400 = vmatpush1.msra.mxu0 %v66
    %401 = vmatprep.subr.mxu0 0.0
    %402 = vmatpush1.msra.mxu0 %v65
    %403 = vmatprep.subr.mxu0 0.0
    %404 = vmatpush1.msra.mxu0 %v64
    %405 = vmatprep.subr.mxu0 0.0
    %406 = vmatpush1.msra.mxu0 %v63
    %407 = vmatprep.subr.mxu0 0.0
    %408 = vmatpush1.msra.mxu0 %v62
    %409 = vmatprep.subr.mxu0 0.0
    %410 = vmatpush1.msra.mxu0 %v61
    %411 = vmatprep.subr.mxu0 0.0
    %412 = vmatpush1.msra.mxu0 %v60
    %413 = vmatprep.subr.mxu0 0.0
    %414 = vmatpush2.msra.mxu0 0.0
    %415 = vmatprep.subr.mxu0 0.0
    %416 = vmatpush2.msra.mxu0 0.0
    %417 = vmatprep.subr.mxu0 0.0
    %418 = vmatpush2.msra.mxu0 0.0
    %419 = vmatprep.subr.mxu0 0.0
    %420 = vmatpush2.msra.mxu0 0.0
    %421 = vmatprep.subr.mxu0 0.0
    %422 = vmatpush2.msra.mxu0 0.0
    %423 = vmatprep.subr.mxu0 0.0
    %424 = vmatpush2.msra.mxu0 0.0
    %425 = vmatprep.subr.mxu0 0.0
    %426 = vmatpush2.msra.mxu0 0.0
    %427 = vmatprep.subr.mxu0 0.0
    %428 = vmatpush2.msra.mxu0 0.0
    %429 = vmatprep.subr.mxu0 0.0
    %430 = vmatpush2.msra.mxu0 0.0
    %431 = vmatprep.subr.mxu0 0.0
    %432 = vmatpush2.msra.mxu0 0.0
    %433 = vmatprep.subr.mxu0 0.0
    %434 = vmatpush2.msra.mxu0 0.0
    %435 = vmatprep.subr.mxu0 0.0
    %436 = vmatpush2.msra.mxu0 0.0
    %437 = vmatprep.subr.mxu0 0.0
    %438 = vmatpush2.msra.mxu0 0.0
    %439 = vmatprep.subr.mxu0 0.0
    %440 = vmatpush2.msra.mxu0 0.0
    %441 = vmatprep.subr.mxu0 0.0
    %442 = vmatpush2.msra.mxu0 0.0
    %443 = vmatprep.subr.mxu0 0.0
    %444 = vmatpush2.msra.mxu0 0.0
    %445 = vmatprep.mubr.f32.mxu0 0.0
    %446 = vmatmul.mubr.f32.gmra.mxu0 %v376
    %v447 = vpop.f32.mrf.mxu0
    %v448 = vadd.f32 0.0, %v447
    %v449 = vpop.f32.mrf.mxu0
    %450 = vdwg.mxu0
    %v451 = vadd.f32 %v380, %v448
    %v452 = vtanh.pop %v451
    %s453 = scalar_lea.vmem [#allocation9], 32
    %454 = vst [vmem:[%s453] sm:$0xff] %v452
    %s455 = scalar_lea.vmem [#allocation3], 40
    %v456 = vld [vmem:[%s455] sm:$0xff]
    %457 = vmatprep.subr.mxu0 0.0
    %458 = vmatpush1.msra.mxu0 %v75
    %459 = vmatprep.subr.mxu0 0.0
    %460 = vmatpush1.msra.mxu0 %v74
    %461 = vmatprep.subr.mxu0 0.0
    %462 = vmatpush1.msra.mxu0 %v73
    %463 = vmatprep.subr.mxu0 0.0
    %464 = vmatpush1.msra.mxu0 %v72
    %465 = vmatprep.subr.mxu0 0.0
    %466 = vmatpush1.msra.mxu0 %v71
    %467 = vmatprep.subr.mxu0 0.0
    %468 = vmatpush1.msra.mxu0 %v70
    %469 = vmatprep.subr.mxu0 0.0
    %470 = vmatpush1.msra.mxu0 %v69
    %471 = vmatprep.subr.mxu0 0.0
    %472 = vmatpush1.msra.mxu0 %v68
    %473 = vmatprep.subr.mxu0 0.0
    %474 = vmatpush1.msra.mxu0 %v67
    %475 = vmatprep.subr.mxu0 0.0
    %476 = vmatpush1.msra.mxu0 %v66
    %477 = vmatprep.subr.mxu0 0.0
    %478 = vmatpush1.msra.mxu0 %v65
    %479 = vmatprep.subr.mxu0 0.0
    %480 = vmatpush1.msra.mxu0 %v64
    %481 = vmatprep.subr.mxu0 0.0
    %482 = vmatpush1.msra.mxu0 %v63
    %483 = vmatprep.subr.mxu0 0.0
    %484 = vmatpush1.msra.mxu0 %v62
    %485 = vmatprep.subr.mxu0 0.0
    %486 = vmatpush1.msra.mxu0 %v61
    %487 = vmatprep.subr.mxu0 0.0
    %488 = vmatpush1.msra.mxu0 %v60
    %489 = vmatprep.subr.mxu0 0.0
    %490 = vmatpush2.msra.mxu0 0.0
    %491 = vmatprep.subr.mxu0 0.0
    %492 = vmatpush2.msra.mxu0 0.0
    %493 = vmatprep.subr.mxu0 0.0
    %494 = vmatpush2.msra.mxu0 0.0
    %495 = vmatprep.subr.mxu0 0.0
    %496 = vmatpush2.msra.mxu0 0.0
    %497 = vmatprep.subr.mxu0 0.0
    %498 = vmatpush2.msra.mxu0 0.0
    %499 = vmatprep.subr.mxu0 0.0
    %500 = vmatpush2.msra.mxu0 0.0
    %501 = vmatprep.subr.mxu0 0.0
    %502 = vmatpush2.msra.mxu0 0.0
    %503 = vmatprep.subr.mxu0 0.0
    %504 = vmatpush2.msra.mxu0 0.0
    %505 = vmatprep.subr.mxu0 0.0
    %506 = vmatpush2.msra.mxu0 0.0
    %507 = vmatprep.subr.mxu0 0.0
    %508 = vmatpush2.msra.mxu0 0.0
    %509 = vmatprep.subr.mxu0 0.0
    %510 = vmatpush2.msra.mxu0 0.0
    %511 = vmatprep.subr.mxu0 0.0
    %512 = vmatpush2.msra.mxu0 0.0
    %513 = vmatprep.subr.mxu0 0.0
    %514 = vmatpush2.msra.mxu0 0.0
    %515 = vmatprep.subr.mxu0 0.0
    %516 = vmatpush2.msra.mxu0 0.0
    %517 = vmatprep.subr.mxu0 0.0
    %518 = vmatpush2.msra.mxu0 0.0
    %519 = vmatprep.subr.mxu0 0.0
    %520 = vmatpush2.msra.mxu0 0.0
    %521 = vmatprep.mubr.f32.mxu0 0.0
    %522 = vmatmul.mubr.f32.gmra.mxu0 %v452
    %v523 = vpop.f32.mrf.mxu0
    %v524 = vadd.f32 0.0, %v523
    %v525 = vpop.f32.mrf.mxu0
    %526 = vdwg.mxu0
    %v527 = vadd.f32 %v456, %v524
    %v528 = vtanh.pop %v527
    %s529 = scalar_lea.vmem [#allocation9], 40
    %530 = vst [vmem:[%s529] sm:$0xff] %v528
    %s531 = scalar_lea.vmem [#allocation3], 48
    %v532 = vld [vmem:[%s531] sm:$0xff]
    %533 = vmatprep.subr.mxu0 0.0
    %534 = vmatpush1.msra.mxu0 %v75
    %535 = vmatprep.subr.mxu0 0.0
    %536 = vmatpush1.msra.mxu0 %v74
    %537 = vmatprep.subr.mxu0 0.0
    %538 = vmatpush1.msra.mxu0 %v73
    %539 = vmatprep.subr.mxu0 0.0
    %540 = vmatpush1.msra.mxu0 %v72
    %541 = vmatprep.subr.mxu0 0.0
    %542 = vmatpush1.msra.mxu0 %v71
    %543 = vmatprep.subr.mxu0 0.0
    %544 = vmatpush1.msra.mxu0 %v70
    %545 = vmatprep.subr.mxu0 0.0
    %546 = vmatpush1.msra.mxu0 %v69
    %547 = vmatprep.subr.mxu0 0.0
    %548 = vmatpush1.msra.mxu0 %v68
    %549 = vmatprep.subr.mxu0 0.0
    %550 = vmatpush1.msra.mxu0 %v67
    %551 = vmatprep.subr.mxu0 0.0
    %552 = vmatpush1.msra.mxu0 %v66
    %553 = vmatprep.subr.mxu0 0.0
    %554 = vmatpush1.msra.mxu0 %v65
    %555 = vmatprep.subr.mxu0 0.0
    %556 = vmatpush1.msra.mxu0 %v64
    %557 = vmatprep.subr.mxu0 0.0
    %558 = vmatpush1.msra.mxu0 %v63
    %559 = vmatprep.subr.mxu0 0.0
    %560 = vmatpush1.msra.mxu0 %v62
    %561 = vmatprep.subr.mxu0 0.0
    %562 = vmatpush1.msra.mxu0 %v61
    %563 = vmatprep.subr.mxu0 0.0
    %564 = vmatpush1.msra.mxu0 %v60
    %565 = vmatprep.subr.mxu0 0.0
    %566 = vmatpush2.msra.mxu0 0.0
    %567 = vmatprep.subr.mxu0 0.0
    %568 = vmatpush2.msra.mxu0 0.0
    %569 = vmatprep.subr.mxu0 0.0
    %570 = vmatpush2.msra.mxu0 0.0
    %571 = vmatprep.subr.mxu0 0.0
    %572 = vmatpush2.msra.mxu0 0.0
    %573 = vmatprep.subr.mxu0 0.0
    %574 = vmatpush2.msra.mxu0 0.0
    %575 = vmatprep.subr.mxu0 0.0
    %576 = vmatpush2.msra.mxu0 0.0
    %577 = vmatprep.subr.mxu0 0.0
    %578 = vmatpush2.msra.mxu0 0.0
    %579 = vmatprep.subr.mxu0 0.0
    %580 = vmatpush2.msra.mxu0 0.0
    %581 = vmatprep.subr.mxu0 0.0
    %582 = vmatpush2.msra.mxu0 0.0
    %583 = vmatprep.subr.mxu0 0.0
    %584 = vmatpush2.msra.mxu0 0.0
    %585 = vmatprep.subr.mxu0 0.0
    %586 = vmatpush2.msra.mxu0 0.0
    %587 = vmatprep.subr.mxu0 0.0
    %588 = vmatpush2.msra.mxu0 0.0
    %589 = vmatprep.subr.mxu0 0.0
    %590 = vmatpush2.msra.mxu0 0.0
    %591 = vmatprep.subr.mxu0 0.0
    %592 = vmatpush2.msra.mxu0 0.0
    %593 = vmatprep.subr.mxu0 0.0
    %594 = vmatpush2.msra.mxu0 0.0
    %595 = vmatprep.subr.mxu0 0.0
    %596 = vmatpush2.msra.mxu0 0.0
    %597 = vmatprep.mubr.f32.mxu0 0.0
    %598 = vmatmul.mubr.f32.gmra.mxu0 %v528
    %v599 = vpop.f32.mrf.mxu0
    %v600 = vadd.f32 0.0, %v599
    %v601 = vpop.f32.mrf.mxu0
    %602 = vdwg.mxu0
    %v603 = vadd.f32 %v532, %v600
    %v604 = vtanh.pop %v603
    %s605 = scalar_lea.vmem [#allocation9], 48
    %606 = vst [vmem:[%s605] sm:$0xff] %v604
    %s607 = scalar_lea.vmem [#allocation3], 56
    %v608 = vld [vmem:[%s607] sm:$0xff]
    %609 = vmatprep.subr.mxu0 0.0
    %610 = vmatpush1.msra.mxu0 %v75
    %611 = vmatprep.subr.mxu0 0.0
    %612 = vmatpush1.msra.mxu0 %v74
    %613 = vmatprep.subr.mxu0 0.0
    %614 = vmatpush1.msra.mxu0 %v73
    %615 = vmatprep.subr.mxu0 0.0
    %616 = vmatpush1.msra.mxu0 %v72
    %617 = vmatprep.subr.mxu0 0.0
    %618 = vmatpush1.msra.mxu0 %v71
    %619 = vmatprep.subr.mxu0 0.0
    %620 = vmatpush1.msra.mxu0 %v70
    %621 = vmatprep.subr.mxu0 0.0
    %622 = vmatpush1.msra.mxu0 %v69
    %623 = vmatprep.subr.mxu0 0.0
    %624 = vmatpush1.msra.mxu0 %v68
    %625 = vmatprep.subr.mxu0 0.0
    %626 = vmatpush1.msra.mxu0 %v67
    %627 = vmatprep.subr.mxu0 0.0
    %628 = vmatpush1.msra.mxu0 %v66
    %629 = vmatprep.subr.mxu0 0.0
    %630 = vmatpush1.msra.mxu0 %v65
    %631 = vmatprep.subr.mxu0 0.0
    %632 = vmatpush1.msra.mxu0 %v64
    %633 = vmatprep.subr.mxu0 0.0
    %634 = vmatpush1.msra.mxu0 %v63
    %635 = vmatprep.subr.mxu0 0.0
    %636 = vmatpush1.msra.mxu0 %v62
    %637 = vmatprep.subr.mxu0 0.0
    %638 = vmatpush1.msra.mxu0 %v61
    %639 = vmatprep.subr.mxu0 0.0
    %640 = vmatpush1.msra.mxu0 %v60
    %641 = vmatprep.subr.mxu0 0.0
    %642 = vmatpush2.msra.mxu0 0.0
    %643 = vmatprep.subr.mxu0 0.0
    %644 = vmatpush2.msra.mxu0 0.0
    %645 = vmatprep.subr.mxu0 0.0
    %646 = vmatpush2.msra.mxu0 0.0
    %647 = vmatprep.subr.mxu0 0.0
    %648 = vmatpush2.msra.mxu0 0.0
    %649 = vmatprep.subr.mxu0 0.0
    %650 = vmatpush2.msra.mxu0 0.0
    %651 = vmatprep.subr.mxu0 0.0
    %652 = vmatpush2.msra.mxu0 0.0
    %653 = vmatprep.subr.mxu0 0.0
    %654 = vmatpush2.msra.mxu0 0.0
    %655 = vmatprep.subr.mxu0 0.0
    %656 = vmatpush2.msra.mxu0 0.0
    %657 = vmatprep.subr.mxu0 0.0
    %658 = vmatpush2.msra.mxu0 0.0
    %659 = vmatprep.subr.mxu0 0.0
    %660 = vmatpush2.msra.mxu0 0.0
    %661 = vmatprep.subr.mxu0 0.0
    %662 = vmatpush2.msra.mxu0 0.0
    %663 = vmatprep.subr.mxu0 0.0
    %664 = vmatpush2.msra.mxu0 0.0
    %665 = vmatprep.subr.mxu0 0.0
    %666 = vmatpush2.msra.mxu0 0.0
    %667 = vmatprep.subr.mxu0 0.0
    %668 = vmatpush2.msra.mxu0 0.0
    %669 = vmatprep.subr.mxu0 0.0
    %670 = vmatpush2.msra.mxu0 0.0
    %671 = vmatprep.subr.mxu0 0.0
    %672 = vmatpush2.msra.mxu0 0.0
    %673 = vmatprep.mubr.f32.mxu0 0.0
    %674 = vmatmul.mubr.f32.gmra.mxu0 %v604
    %v675 = vpop.f32.mrf.mxu0
    %v676 = vadd.f32 0.0, %v675
    %v677 = vpop.f32.mrf.mxu0
    %678 = vdwg.mxu0
    %v679 = vadd.f32 %v608, %v676
    %v680 = vtanh.pop %v679
    %s681 = scalar_lea.vmem [#allocation9], 56
    %682 = vst [vmem:[%s681] sm:$0xff] %v680
    %683 = vst [vmem:[#allocation2] sm:$0xff] %v680
    // Predicated region
    $region30: #{tpu_custom_call.1} parent=1 // pred_check
      _
    $region31: #{tpu_custom_call.1} parent=1 // pred_check_branch
      %685 = sbr.rel (0) target = $region33
    $region32: #{tpu_custom_call.1} parent=1 // pred_region
      %s687 = ssub.s32 1024, 1024
      %688 = vsyncadd [#allocation5], %s687
      %s689 = sshll.u32 [#allocation9], 4
      %s690 = int_to_ptr.vmem [resolvable:$true] %s689
      %695 = dma.vmem_to_hbm [thread:$0]  %s690, 1024, %s3, [#allocation5], 128, 128, 8
    $region33: #{tpu_custom_call.1} parent=1 // pred_fallthru
      _
    // Predicated region
    $region34: #{tpu_custom_call.1} parent=1 // pred_check
      _
    $region35: #{tpu_custom_call.1} parent=1 // pred_check_branch
      %697 = sbr.rel (0) target = $region37
    $region36: #{tpu_custom_call.1} parent=1 // pred_region
      %698 = dma.done [#allocation5], 1024
    $region37: #{tpu_custom_call.1} parent=1 // pred_fallthru
      _
    %699 = vsyncpa [#allocation4], 1
    %700 = vsyncpa [#allocation7], 1
    %701 = vsyncpa [#allocation5], 1

// kernel: tpu_custom_call.1
$region0: #{tpu_custom_call.1}
  #allocation0 [shape = 'u32[]', space=smem, size = 0x4, offset = 0x4, fixed_abs, tag = 'smem constant byte address 0x4 - core index']
  #allocation1 [shape = 'u32[144,128]{1,0:T(1,128)}', space=vmem, size = 0x12000, scoped, tag = 'internal scratch']
  #allocation2 [shape = 'f32[8,128]{1,0:T(8,128)}', space=vmem, size = 0x1000, scoped, tag = 'scratch operand']
  %s0 = inlined_call_operand.hbm [shape: f32[8,8,128], index: 0, kind: input, shape index: {}]
  %s1 = inlined_call_operand.hbm [shape: f32[8,128], index: 1, kind: input, shape index: {}]
  %s2 = inlined_call_operand.hbm [shape: f32[128,128], index: 2, kind: input, shape index: {}]
  %s3 = inlined_call_operand.hbm [shape: f32[8,8,128], index: 3, kind: output, shape index: {}]
  %s4 = sld [smem:[#allocation0]]
  $region38: #{tpu_custom_call.1} parent=0
    _
  %s6 = ssub.s32 1, %s4
  %s7 = scalar_select 0, %s6, %s4
  $region1: #{tpu_custom_call.1} parent=0
    #allocation3 [shape = 'u8[32768]{0}', space=vmem, size = 0x8000, scoped, tag = 'input window, operand 0, single buffered']
    #allocation4 [shape = 's32[1]{0}', space=sflag, size = 0x4, scoped, tag = 'scoped memory for tpu_custom_call.1']
    #allocation5 [shape = 's32[1]{0}', space=sflag, size = 0x4, scoped, tag = 'scoped memory for tpu_custom_call.1']
    #allocation6 [shape = 'u8[4096]{0}', space=vmem, size = 0x1000, scoped, tag = 'input window, operand 1, single buffered']
    #allocation7 [shape = 's32[1]{0}', space=sflag, size = 0x4, scoped, tag = 'scoped memory for tpu_custom_call.1']
    #allocation8 [shape = 'u8[65536]{0}', space=vmem, size = 0x10000, scoped, tag = 'input window, operand 2, single buffered']
    #allocation9 [shape = 'u8[32768]{0}', space=vmem, size = 0x8000, scoped, tag = 'output window, operand 0, single buffered']
    %8 = vsyncpa [#allocation4], 0
    %9 = vsyncpa [#allocation7], 0
    %10 = vsyncpa [#allocation5], 0
    // Predicated region
    $region2: #{tpu_custom_call.1} parent=1 // pred_check
      _
    $region3: #{tpu_custom_call.1} parent=1 // pred_check_branch
      %12 = sbr.rel (0) target = $region5
    $region4: #{tpu_custom_call.1} parent=1 // pred_region
      %s14 = ssub.s32 1024, 1024
      %15 = vsyncadd [#allocation4], %s14
      %s16 = sshll.u32 [#allocation3], 4
      %s17 = int_to_ptr.vmem [resolvable:$true] %s16
      %22 = dma.hbm_to_vmem [thread:$0]  %s0, 1024, %s17, [#allocation4], 128, 128, 8
    $region5: #{tpu_custom_call.1} parent=1 // pred_fallthru
      _
    // Predicated region
    $region6: #{tpu_custom_call.1} parent=1 // pred_check
      _
    $region7: #{tpu_custom_call.1} parent=1 // pred_check_branch
      %24 = sbr.rel (0) target = $region9
    $region8: #{tpu_custom_call.1} parent=1 // pred_region
      %s26 = ssub.s32 128, 128
      %27 = vsyncadd [#allocation7], %s26
      %s29 = sshll.u32 [#allocation6], 4
      %s30 = int_to_ptr.vmem [resolvable:$true] %s29
      %32 = dma.hbm_to_vmem [thread:$0]  %s1, 128, %s30, [#allocation7]
    $region9: #{tpu_custom_call.1} parent=1 // pred_fallthru
      _
    // Predicated region
    $region10: #{tpu_custom_call.1} parent=1 // pred_check
      _
    $region11: #{tpu_custom_call.1} parent=1 // pred_check_branch
      %34 = sbr.rel (0) target = $region13
    $region12: #{tpu_custom_call.1} parent=1 // pred_region
      %s36 = ssub.s32 2048, 2048
      %37 = vsyncadd [#allocation7], %s36
      %s38 = sshll.u32 [#allocation8], 4
      %s39 = int_to_ptr.vmem [resolvable:$true] %s38
      %44 = dma.hbm_to_vmem [thread:$0]  %s2, 2048, %s39, [#allocation7], 128, 128, 8
    $region13: #{tpu_custom_call.1} parent=1 // pred_fallthru
      _
    // Predicated region
    $region14: #{tpu_custom_call.1} parent=1 // pred_check
      _
    $region15: #{tpu_custom_call.1} parent=1 // pred_check_branch
      %46 = sbr.rel (0) target = $region17
    $region16: #{tpu_custom_call.1} parent=1 // pred_region
      %47 = dma.done [#allocation4], 1024
    $region17: #{tpu_custom_call.1} parent=1 // pred_fallthru
      _
    // Predicated region
    $region18: #{tpu_custom_call.1} parent=1 // pred_check
      _
    $region19: #{tpu_custom_call.1} parent=1 // pred_check_branch
      %49 = sbr.rel (0) target = $region21
    $region20: #{tpu_custom_call.1} parent=1 // pred_region
      %50 = dma.done [#allocation7], 128
    $region21: #{tpu_custom_call.1} parent=1 // pred_fallthru
      _
    // Predicated region
    $region22: #{tpu_custom_call.1} parent=1 // pred_check
      _
    $region23: #{tpu_custom_call.1} parent=1 // pred_check_branch
      %52 = sbr.rel (0) target = $region25
    $region24: #{tpu_custom_call.1} parent=1 // pred_region
      %53 = dma.done [#allocation7], 2048
    $region25: #{tpu_custom_call.1} parent=1 // pred_fallthru
      _
    %p54 = scmp.eq.s32.totalorder 0, 0
    // Predicated region
    $region26: #{tpu_custom_call.1} parent=1 // pred_check
      %p55 = pneg %p54
    $region27: #{tpu_custom_call.1} parent=1 // pred_check_branch
      %57 = sbr.rel (%p55) target = $region29
    $region28: #{tpu_custom_call.1} parent=1 // pred_region
      %v58 = vld [vmem:[#allocation6] sm:$0xff]
      %59 = vst [vmem:[#allocation2] sm:$0xff] %v58
    $region29: #{tpu_custom_call.1} parent=1 // pred_fallthru
      _
    %v60 = vld [vmem:[#allocation8] sm:$0xff]
    %v61 = vld [vmem:[#allocation8 + $0x8] sm:$0xff]
    %v62 = vld [vmem:[#allocation8 + $0x10] sm:$0xff]
    %v63 = vld [vmem:[#allocation8 + $0x18] sm:$0xff]
    %v64 = vld [vmem:[#allocation8 + $0x20] sm:$0xff]
    %v65 = vld [vmem:[#allocation8 + $0x28] sm:$0xff]
    %v66 = vld [vmem:[#allocation8 + $0x30] sm:$0xff]
    %v67 = vld [vmem:[#allocation8 + $0x38] sm:$0xff]
    %v68 = vld [vmem:[#allocation8 + $0x40] sm:$0xff]
    %v69 = vld [vmem:[#allocation8 + $0x48] sm:$0xff]
    %v70 = vld [vmem:[#allocation8 + $0x50] sm:$0xff]
    %v71 = vld [vmem:[#allocation8 + $0x58] sm:$0xff]
    %v72 = vld [vmem:[#allocation8 + $0x60] sm:$0xff]
    %v73 = vld [vmem:[#allocation8 + $0x68] sm:$0xff]
    %v74 = vld [vmem:[#allocation8 + $0x70] sm:$0xff]
    %v75 = vld [vmem:[#allocation8 + $0x78] sm:$0xff]
    %v76 = vld [vmem:[#allocation2] sm:$0xff]
    %v77 = vld [vmem:[#allocation3] sm:$0xff]
    %78 = vmatprep.subr.mxu0 0.0
    %79 = vmatpush1.msra.mxu0 %v75
    %80 = vmatprep.subr.mxu0 0.0
    %81 = vmatpush1.msra.mxu0 %v74
    %82 = vmatprep.subr.mxu0 0.0
    %83 = vmatpush1.msra.mxu0 %v73
    %84 = vmatprep.subr.mxu0 0.0
    %85 = vmatpush1.msra.mxu0 %v72
    %86 = vmatprep.subr.mxu0 0.0
    %87 = vmatpush1.msra.mxu0 %v71
    %88 = vmatprep.subr.mxu0 0.0
    %89 = vmatpush1.msra.mxu0 %v70
    %90 = vmatprep.subr.mxu0 0.0
    %91 = vmatpush1.msra.mxu0 %v69
    %92 = vmatprep.subr.mxu0 0.0
    %93 = vmatpush1.msra.mxu0 %v68
    %94 = vmatprep.subr.mxu0 0.0
    %95 = vmatpush1.msra.mxu0 %v67
    %96 = vmatprep.subr.mxu0 0.0
    %97 = vmatpush1.msra.mxu0 %v66
    %98 = vmatprep.subr.mxu0 0.0
    %99 = vmatpush1.msra.mxu0 %v65
    %100 = vmatprep.subr.mxu0 0.0
    %101 = vmatpush1.msra.mxu0 %v64
    %102 = vmatprep.subr.mxu0 0.0
    %103 = vmatpush1.msra.mxu0 %v63
    %104 = vmatprep.subr.mxu0 0.0
    %105 = vmatpush1.msra.mxu0 %v62
    %106 = vmatprep.subr.mxu0 0.0
    %107 = vmatpush1.msra.mxu0 %v61
    %108 = vmatprep.subr.mxu0 0.0
    %109 = vmatpush1.msra.mxu0 %v60
    %110 = vmatprep.subr.mxu0 0.0
    %111 = vmatpush2.msra.mxu0 0.0
    %112 = vmatprep.subr.mxu0 0.0
    %113 = vmatpush2.msra.mxu0 0.0
    %114 = vmatprep.subr.mxu0 0.0
    %115 = vmatpush2.msra.mxu0 0.0
    %116 = vmatprep.subr.mxu0 0.0
    %117 = vmatpush2.msra.mxu0 0.0
    %118 = vmatprep.subr.mxu0 0.0
    %119 = vmatpush2.msra.mxu0 0.0
    %120 = vmatprep.subr.mxu0 0.0
    %121 = vmatpush2.msra.mxu0 0.0
    %122 = vmatprep.subr.mxu0 0.0
    %123 = vmatpush2.msra.mxu0 0.0
    %124 = vmatprep.subr.mxu0 0.0
    %125 = vmatpush2.msra.mxu0 0.0
    %126 = vmatprep.subr.mxu0 0.0
    %127 = vmatpush2.msra.mxu0 0.0
    %128 = vmatprep.subr.mxu0 0.0
    %129 = vmatpush2.msra.mxu0 0.0
    %130 = vmatprep.subr.mxu0 0.0
    %131 = vmatpush2.msra.mxu0 0.0
    %132 = vmatprep.subr.mxu0 0.0
    %133 = vmatpush2.msra.mxu0 0.0
    %134 = vmatprep.subr.mxu0 0.0
    %135 = vmatpush2.msra.mxu0 0.0
    %136 = vmatprep.subr.mxu0 0.0
    %137 = vmatpush2.msra.mxu0 0.0
    %138 = vmatprep.subr.mxu0 0.0
    %139 = vmatpush2.msra.mxu0 0.0
    %140 = vmatprep.subr.mxu0 0.0
    %141 = vmatpush2.msra.mxu0 0.0
    %142 = vmatprep.mubr.f32.mxu0 0.0
    %143 = vmatmul.mubr.f32.gmra.mxu0 %v76
    %v144 = vpop.f32.mrf.mxu0
    %v145 = vadd.f32 0.0, %v144
    %v146 = vpop.f32.mrf.mxu0
    %147 = vdwg.mxu0
    %v148 = vadd.f32 %v77, %v145
    %v149 = vtanh.pop %v148
    %150 = vst [vmem:[#allocation9] sm:$0xff] %v149
    %s151 = scalar_lea.vmem [#allocation3], 8
    %v152 = vld [vmem:[%s151] sm:$0xff]
    %153 = vmatprep.subr.mxu0 0.0
    %154 = vmatpush1.msra.mxu0 %v75
    %155 = vmatprep.subr.mxu0 0.0
    %156 = vmatpush1.msra.mxu0 %v74
    %157 = vmatprep.subr.mxu0 0.0
    %158 = vmatpush1.msra.mxu0 %v73
    %159 = vmatprep.subr.mxu0 0.0
    %160 = vmatpush1.msra.mxu0 %v72
    %161 = vmatprep.subr.mxu0 0.0
    %162 = vmatpush1.msra.mxu0 %v71
    %163 = vmatprep.subr.mxu0 0.0
    %164 = vmatpush1.msra.mxu0 %v70
    %165 = vmatprep.subr.mxu0 0.0
    %166 = vmatpush1.msra.mxu0 %v69
    %167 = vmatprep.subr.mxu0 0.0
    %168 = vmatpush1.msra.mxu0 %v68
    %169 = vmatprep.subr.mxu0 0.0
    %170 = vmatpush1.msra.mxu0 %v67
    %171 = vmatprep.subr.mxu0 0.0
    %172 = vmatpush1.msra.mxu0 %v66
    %173 = vmatprep.subr.mxu0 0.0
    %174 = vmatpush1.msra.mxu0 %v65
    %175 = vmatprep.subr.mxu0 0.0
    %176 = vmatpush1.msra.mxu0 %v64
    %177 = vmatprep.subr.mxu0 0.0
    %178 = vmatpush1.msra.mxu0 %v63
    %179 = vmatprep.subr.mxu0 0.0
    %180 = vmatpush1.msra.mxu0 %v62
    %181 = vmatprep.subr.mxu0 0.0
    %182 = vmatpush1.msra.mxu0 %v61
    %183 = vmatprep.subr.mxu0 0.0
    %184 = vmatpush1.msra.mxu0 %v60
    %185 = vmatprep.subr.mxu0 0.0
    %186 = vmatpush2.msra.mxu0 0.0
    %187 = vmatprep.subr.mxu0 0.0
    %188 = vmatpush2.msra.mxu0 0.0
    %189 = vmatprep.subr.mxu0 0.0
    %190 = vmatpush2.msra.mxu0 0.0
    %191 = vmatprep.subr.mxu0 0.0
    %192 = vmatpush2.msra.mxu0 0.0
    %193 = vmatprep.subr.mxu0 0.0
    %194 = vmatpush2.msra.mxu0 0.0
    %195 = vmatprep.subr.mxu0 0.0
    %196 = vmatpush2.msra.mxu0 0.0
    %197 = vmatprep.subr.mxu0 0.0
    %198 = vmatpush2.msra.mxu0 0.0
    %199 = vmatprep.subr.mxu0 0.0
    %200 = vmatpush2.msra.mxu0 0.0
    %201 = vmatprep.subr.mxu0 0.0
    %202 = vmatpush2.msra.mxu0 0.0
    %203 = vmatprep.subr.mxu0 0.0
    %204 = vmatpush2.msra.mxu0 0.0
    %205 = vmatprep.subr.mxu0 0.0
    %206 = vmatpush2.msra.mxu0 0.0
    %207 = vmatprep.subr.mxu0 0.0
    %208 = vmatpush2.msra.mxu0 0.0
    %209 = vmatprep.subr.mxu0 0.0
    %210 = vmatpush2.msra.mxu0 0.0
    %211 = vmatprep.subr.mxu0 0.0
    %212 = vmatpush2.msra.mxu0 0.0
    %213 = vmatprep.subr.mxu0 0.0
    %214 = vmatpush2.msra.mxu0 0.0
    %215 = vmatprep.subr.mxu0 0.0
    %216 = vmatpush2.msra.mxu0 0.0
    %217 = vmatprep.mubr.f32.mxu0 0.0
    %218 = vmatmul.mubr.f32.gmra.mxu0 %v149
    %v219 = vpop.f32.mrf.mxu0
    %v220 = vadd.f32 0.0, %v219
    %v221 = vpop.f32.mrf.mxu0
    %222 = vdwg.mxu0
    %v223 = vadd.f32 %v152, %v220
    %v224 = vtanh.pop %v223
    %s225 = scalar_lea.vmem [#allocation9], 8
    %226 = vst [vmem:[%s225] sm:$0xff] %v224
    %s227 = scalar_lea.vmem [#allocation3], 16
    %v228 = vld [vmem:[%s227] sm:$0xff]
    %229 = vmatprep.subr.mxu0 0.0
    %230 = vmatpush1.msra.mxu0 %v75
    %231 = vmatprep.subr.mxu0 0.0
    %232 = vmatpush1.msra.mxu0 %v74
    %233 = vmatprep.subr.mxu0 0.0
    %234 = vmatpush1.msra.mxu0 %v73
    %235 = vmatprep.subr.mxu0 0.0
    %236 = vmatpush1.msra.mxu0 %v72
    %237 = vmatprep.subr.mxu0 0.0
    %238 = vmatpush1.msra.mxu0 %v71
    %239 = vmatprep.subr.mxu0 0.0
    %240 = vmatpush1.msra.mxu0 %v70
    %241 = vmatprep.subr.mxu0 0.0
    %242 = vmatpush1.msra.mxu0 %v69
    %243 = vmatprep.subr.mxu0 0.0
    %244 = vmatpush1.msra.mxu0 %v68
    %245 = vmatprep.subr.mxu0 0.0
    %246 = vmatpush1.msra.mxu0 %v67
    %247 = vmatprep.subr.mxu0 0.0
    %248 = vmatpush1.msra.mxu0 %v66
    %249 = vmatprep.subr.mxu0 0.0
    %250 = vmatpush1.msra.mxu0 %v65
    %251 = vmatprep.subr.mxu0 0.0
    %252 = vmatpush1.msra.mxu0 %v64
    %253 = vmatprep.subr.mxu0 0.0
    %254 = vmatpush1.msra.mxu0 %v63
    %255 = vmatprep.subr.mxu0 0.0
    %256 = vmatpush1.msra.mxu0 %v62
    %257 = vmatprep.subr.mxu0 0.0
    %258 = vmatpush1.msra.mxu0 %v61
    %259 = vmatprep.subr.mxu0 0.0
    %260 = vmatpush1.msra.mxu0 %v60
    %261 = vmatprep.subr.mxu0 0.0
    %262 = vmatpush2.msra.mxu0 0.0
    %263 = vmatprep.subr.mxu0 0.0
    %264 = vmatpush2.msra.mxu0 0.0
    %265 = vmatprep.subr.mxu0 0.0
    %266 = vmatpush2.msra.mxu0 0.0
    %267 = vmatprep.subr.mxu0 0.0
    %268 = vmatpush2.msra.mxu0 0.0
    %269 = vmatprep.subr.mxu0 0.0
    %270 = vmatpush2.msra.mxu0 0.0
    %271 = vmatprep.subr.mxu0 0.0
    %272 = vmatpush2.msra.mxu0 0.0
    %273 = vmatprep.subr.mxu0 0.0
    %274 = vmatpush2.msra.mxu0 0.0
    %275 = vmatprep.subr.mxu0 0.0
    %276 = vmatpush2.msra.mxu0 0.0
    %277 = vmatprep.subr.mxu0 0.0
    %278 = vmatpush2.msra.mxu0 0.0
    %279 = vmatprep.subr.mxu0 0.0
    %280 = vmatpush2.msra.mxu0 0.0
    %281 = vmatprep.subr.mxu0 0.0
    %282 = vmatpush2.msra.mxu0 0.0
    %283 = vmatprep.subr.mxu0 0.0
    %284 = vmatpush2.msra.mxu0 0.0
    %285 = vmatprep.subr.mxu0 0.0
    %286 = vmatpush2.msra.mxu0 0.0
    %287 = vmatprep.subr.mxu0 0.0
    %288 = vmatpush2.msra.mxu0 0.0
    %289 = vmatprep.subr.mxu0 0.0
    %290 = vmatpush2.msra.mxu0 0.0
    %291 = vmatprep.subr.mxu0 0.0
    %292 = vmatpush2.msra.mxu0 0.0
    %293 = vmatprep.mubr.f32.mxu0 0.0
    %294 = vmatmul.mubr.f32.gmra.mxu0 %v224
    %v295 = vpop.f32.mrf.mxu0
    %v296 = vadd.f32 0.0, %v295
    %v297 = vpop.f32.mrf.mxu0
    %298 = vdwg.mxu0
    %v299 = vadd.f32 %v228, %v296
    %v300 = vtanh.pop %v299
    %s301 = scalar_lea.vmem [#allocation9], 16
    %302 = vst [vmem:[%s301] sm:$0xff] %v300
    %s303 = scalar_lea.vmem [#allocation3], 24
    %v304 = vld [vmem:[%s303] sm:$0xff]
    %305 = vmatprep.subr.mxu0 0.0
    %306 = vmatpush1.msra.mxu0 %v75
    %307 = vmatprep.subr.mxu0 0.0
    %308 = vmatpush1.msra.mxu0 %v74
    %309 = vmatprep.subr.mxu0 0.0
    %310 = vmatpush1.msra.mxu0 %v73
    %311 = vmatprep.subr.mxu0 0.0
    %312 = vmatpush1.msra.mxu0 %v72
    %313 = vmatprep.subr.mxu0 0.0
    %314 = vmatpush1.msra.mxu0 %v71
    %315 = vmatprep.subr.mxu0 0.0
    %316 = vmatpush1.msra.mxu0 %v70
    %317 = vmatprep.subr.mxu0 0.0
    %318 = vmatpush1.msra.mxu0 %v69
    %319 = vmatprep.subr.mxu0 0.0
    %320 = vmatpush1.msra.mxu0 %v68
    %321 = vmatprep.subr.mxu0 0.0
    %322 = vmatpush1.msra.mxu0 %v67
    %323 = vmatprep.subr.mxu0 0.0
    %324 = vmatpush1.msra.mxu0 %v66
    %325 = vmatprep.subr.mxu0 0.0
    %326 = vmatpush1.msra.mxu0 %v65
    %327 = vmatprep.subr.mxu0 0.0
    %328 = vmatpush1.msra.mxu0 %v64
    %329 = vmatprep.subr.mxu0 0.0
    %330 = vmatpush1.msra.mxu0 %v63
    %331 = vmatprep.subr.mxu0 0.0
    %332 = vmatpush1.msra.mxu0 %v62
    %333 = vmatprep.subr.mxu0 0.0
    %334 = vmatpush1.msra.mxu0 %v61
    %335 = vmatprep.subr.mxu0 0.0
    %336 = vmatpush1.msra.mxu0 %v60
    %337 = vmatprep.subr.mxu0 0.0
    %338 = vmatpush2.msra.mxu0 0.0
    %339 = vmatprep.subr.mxu0 0.0
    %340 = vmatpush2.msra.mxu0 0.0
    %341 = vmatprep.subr.mxu0 0.0
    %342 = vmatpush2.msra.mxu0 0.0
    %343 = vmatprep.subr.mxu0 0.0
    %344 = vmatpush2.msra.mxu0 0.0
    %345 = vmatprep.subr.mxu0 0.0
    %346 = vmatpush2.msra.mxu0 0.0
    %347 = vmatprep.subr.mxu0 0.0
    %348 = vmatpush2.msra.mxu0 0.0
    %349 = vmatprep.subr.mxu0 0.0
    %350 = vmatpush2.msra.mxu0 0.0
    %351 = vmatprep.subr.mxu0 0.0
    %352 = vmatpush2.msra.mxu0 0.0
    %353 = vmatprep.subr.mxu0 0.0
    %354 = vmatpush2.msra.mxu0 0.0
    %355 = vmatprep.subr.mxu0 0.0
    %356 = vmatpush2.msra.mxu0 0.0
    %357 = vmatprep.subr.mxu0 0.0
    %358 = vmatpush2.msra.mxu0 0.0
    %359 = vmatprep.subr.mxu0 0.0
    %360 = vmatpush2.msra.mxu0 0.0
    %361 = vmatprep.subr.mxu0 0.0
    %362 = vmatpush2.msra.mxu0 0.0
    %363 = vmatprep.subr.mxu0 0.0
    %364 = vmatpush2.msra.mxu0 0.0
    %365 = vmatprep.subr.mxu0 0.0
    %366 = vmatpush2.msra.mxu0 0.0
    %367 = vmatprep.subr.mxu0 0.0
    %368 = vmatpush2.msra.mxu0 0.0
    %369 = vmatprep.mubr.f32.mxu0 0.0
    %370 = vmatmul.mubr.f32.gmra.mxu0 %v300
    %v371 = vpop.f32.mrf.mxu0
    %v372 = vadd.f32 0.0, %v371
    %v373 = vpop.f32.mrf.mxu0
    %374 = vdwg.mxu0
    %v375 = vadd.f32 %v304, %v372
    %v376 = vtanh.pop %v375
    %s377 = scalar_lea.vmem [#allocation9], 24
    %378 = vst [vmem:[%s377] sm:$0xff] %v376
    %s379 = scalar_lea.vmem [#allocation3], 32
    %v380 = vld [vmem:[%s379] sm:$0xff]
    %381 = vmatprep.subr.mxu0 0.0
    %382 = vmatpush1.msra.mxu0 %v75
    %383 = vmatprep.subr.mxu0 0.0
    %384 = vmatpush1.msra.mxu0 %v74
    %385 = vmatprep.subr.mxu0 0.0
    %386 = vmatpush1.msra.mxu0 %v73
    %387 = vmatprep.subr.mxu0 0.0
    %388 = vmatpush1.msra.mxu0 %v72
    %389 = vmatprep.subr.mxu0 0.0
    %390 = vmatpush1.msra.mxu0 %v71
    %391 = vmatprep.subr.mxu0 0.0
    %392 = vmatpush1.msra.mxu0 %v70
    %393 = vmatprep.subr.mxu0 0.0
    %394 = vmatpush1.msra.mxu0 %v69
    %395 = vmatprep.subr.mxu0 0.0
    %396 = vmatpush1.msra.mxu0 %v68
    %397 = vmatprep.subr.mxu0 0.0
    %398 = vmatpush1.msra.mxu0 %v67
    %399 = vmatprep.subr.mxu0 0.0
    %400 = vmatpush1.msra.mxu0 %v66
    %401 = vmatprep.subr.mxu0 0.0
    %402 = vmatpush1.msra.mxu0 %v65
    %403 = vmatprep.subr.mxu0 0.0
    %404 = vmatpush1.msra.mxu0 %v64
    %405 = vmatprep.subr.mxu0 0.0
    %406 = vmatpush1.msra.mxu0 %v63
    %407 = vmatprep.subr.mxu0 0.0
    %408 = vmatpush1.msra.mxu0 %v62
    %409 = vmatprep.subr.mxu0 0.0
    %410 = vmatpush1.msra.mxu0 %v61
    %411 = vmatprep.subr.mxu0 0.0
    %412 = vmatpush1.msra.mxu0 %v60
    %413 = vmatprep.subr.mxu0 0.0
    %414 = vmatpush2.msra.mxu0 0.0
    %415 = vmatprep.subr.mxu0 0.0
    %416 = vmatpush2.msra.mxu0 0.0
    %417 = vmatprep.subr.mxu0 0.0
    %418 = vmatpush2.msra.mxu0 0.0
    %419 = vmatprep.subr.mxu0 0.0
    %420 = vmatpush2.msra.mxu0 0.0
    %421 = vmatprep.subr.mxu0 0.0
    %422 = vmatpush2.msra.mxu0 0.0
    %423 = vmatprep.subr.mxu0 0.0
    %424 = vmatpush2.msra.mxu0 0.0
    %425 = vmatprep.subr.mxu0 0.0
    %426 = vmatpush2.msra.mxu0 0.0
    %427 = vmatprep.subr.mxu0 0.0
    %428 = vmatpush2.msra.mxu0 0.0
    %429 = vmatprep.subr.mxu0 0.0
    %430 = vmatpush2.msra.mxu0 0.0
    %431 = vmatprep.subr.mxu0 0.0
    %432 = vmatpush2.msra.mxu0 0.0
    %433 = vmatprep.subr.mxu0 0.0
    %434 = vmatpush2.msra.mxu0 0.0
    %435 = vmatprep.subr.mxu0 0.0
    %436 = vmatpush2.msra.mxu0 0.0
    %437 = vmatprep.subr.mxu0 0.0
    %438 = vmatpush2.msra.mxu0 0.0
    %439 = vmatprep.subr.mxu0 0.0
    %440 = vmatpush2.msra.mxu0 0.0
    %441 = vmatprep.subr.mxu0 0.0
    %442 = vmatpush2.msra.mxu0 0.0
    %443 = vmatprep.subr.mxu0 0.0
    %444 = vmatpush2.msra.mxu0 0.0
    %445 = vmatprep.mubr.f32.mxu0 0.0
    %446 = vmatmul.mubr.f32.gmra.mxu0 %v376
    %v447 = vpop.f32.mrf.mxu0
    %v448 = vadd.f32 0.0, %v447
    %v449 = vpop.f32.mrf.mxu0
    %450 = vdwg.mxu0
    %v451 = vadd.f32 %v380, %v448
    %v452 = vtanh.pop %v451
    %s453 = scalar_lea.vmem [#allocation9], 32
    %454 = vst [vmem:[%s453] sm:$0xff] %v452
    %s455 = scalar_lea.vmem [#allocation3], 40
    %v456 = vld [vmem:[%s455] sm:$0xff]
    %457 = vmatprep.subr.mxu0 0.0
    %458 = vmatpush1.msra.mxu0 %v75
    %459 = vmatprep.subr.mxu0 0.0
    %460 = vmatpush1.msra.mxu0 %v74
    %461 = vmatprep.subr.mxu0 0.0
    %462 = vmatpush1.msra.mxu0 %v73
    %463 = vmatprep.subr.mxu0 0.0
    %464 = vmatpush1.msra.mxu0 %v72
    %465 = vmatprep.subr.mxu0 0.0
    %466 = vmatpush1.msra.mxu0 %v71
    %467 = vmatprep.subr.mxu0 0.0
    %468 = vmatpush1.msra.mxu0 %v70
    %469 = vmatprep.subr.mxu0 0.0
    %470 = vmatpush1.msra.mxu0 %v69
    %471 = vmatprep.subr.mxu0 0.0
    %472 = vmatpush1.msra.mxu0 %v68
    %473 = vmatprep.subr.mxu0 0.0
    %474 = vmatpush1.msra.mxu0 %v67
    %475 = vmatprep.subr.mxu0 0.0
    %476 = vmatpush1.msra.mxu0 %v66
    %477 = vmatprep.subr.mxu0 0.0
    %478 = vmatpush1.msra.mxu0 %v65
    %479 = vmatprep.subr.mxu0 0.0
    %480 = vmatpush1.msra.mxu0 %v64
    %481 = vmatprep.subr.mxu0 0.0
    %482 = vmatpush1.msra.mxu0 %v63
    %483 = vmatprep.subr.mxu0 0.0
    %484 = vmatpush1.msra.mxu0 %v62
    %485 = vmatprep.subr.mxu0 0.0
    %486 = vmatpush1.msra.mxu0 %v61
    %487 = vmatprep.subr.mxu0 0.0
    %488 = vmatpush1.msra.mxu0 %v60
    %489 = vmatprep.subr.mxu0 0.0
    %490 = vmatpush2.msra.mxu0 0.0
    %491 = vmatprep.subr.mxu0 0.0
    %492 = vmatpush2.msra.mxu0 0.0
    %493 = vmatprep.subr.mxu0 0.0
    %494 = vmatpush2.msra.mxu0 0.0
    %495 = vmatprep.subr.mxu0 0.0
    %496 = vmatpush2.msra.mxu0 0.0
    %497 = vmatprep.subr.mxu0 0.0
    %498 = vmatpush2.msra.mxu0 0.0
    %499 = vmatprep.subr.mxu0 0.0
    %500 = vmatpush2.msra.mxu0 0.0
    %501 = vmatprep.subr.mxu0 0.0
    %502 = vmatpush2.msra.mxu0 0.0
    %503 = vmatprep.subr.mxu0 0.0
    %504 = vmatpush2.msra.mxu0 0.0
    %505 = vmatprep.subr.mxu0 0.0
    %506 = vmatpush2.msra.mxu0 0.0
    %507 = vmatprep.subr.mxu0 0.0
    %508 = vmatpush2.msra.mxu0 0.0
    %509 = vmatprep.subr.mxu0 0.0
    %510 = vmatpush2.msra.mxu0 0.0
    %511 = vmatprep.subr.mxu0 0.0
    %512 = vmatpush2.msra.mxu0 0.0
    %513 = vmatprep.subr.mxu0 0.0
    %514 = vmatpush2.msra.mxu0 0.0
    %515 = vmatprep.subr.mxu0 0.0
    %516 = vmatpush2.msra.mxu0 0.0
    %517 = vmatprep.subr.mxu0 0.0
    %518 = vmatpush2.msra.mxu0 0.0
    %519 = vmatprep.subr.mxu0 0.0
    %520 = vmatpush2.msra.mxu0 0.0
    %521 = vmatprep.mubr.f32.mxu0 0.0
    %522 = vmatmul.mubr.f32.gmra.mxu0 %v452
    %v523 = vpop.f32.mrf.mxu0
    %v524 = vadd.f32 0.0, %v523
    %v525 = vpop.f32.mrf.mxu0
    %526 = vdwg.mxu0
    %v527 = vadd.f32 %v456, %v524
    %v528 = vtanh.pop %v527
    %s529 = scalar_lea.vmem [#allocation9], 40
    %530 = vst [vmem:[%s529] sm:$0xff] %v528
    %s531 = scalar_lea.vmem [#allocation3], 48
    %v532 = vld [vmem:[%s531] sm:$0xff]
    %533 = vmatprep.subr.mxu0 0.0
    %534 = vmatpush1.msra.mxu0 %v75
    %535 = vmatprep.subr.mxu0 0.0
    %536 = vmatpush1.msra.mxu0 %v74
    %537 = vmatprep.subr.mxu0 0.0
    %538 = vmatpush1.msra.mxu0 %v73
    %539 = vmatprep.subr.mxu0 0.0
    %540 = vmatpush1.msra.mxu0 %v72
    %541 = vmatprep.subr.mxu0 0.0
    %542 = vmatpush1.msra.mxu0 %v71
    %543 = vmatprep.subr.mxu0 0.0
    %544 = vmatpush1.msra.mxu0 %v70
    %545 = vmatprep.subr.mxu0 0.0
    %546 = vmatpush1.msra.mxu0 %v69
    %547 = vmatprep.subr.mxu0 0.0
    %548 = vmatpush1.msra.mxu0 %v68
    %549 = vmatprep.subr.mxu0 0.0
    %550 = vmatpush1.msra.mxu0 %v67
    %551 = vmatprep.subr.mxu0 0.0
    %552 = vmatpush1.msra.mxu0 %v66
    %553 = vmatprep.subr.mxu0 0.0
    %554 = vmatpush1.msra.mxu0 %v65
    %555 = vmatprep.subr.mxu0 0.0
    %556 = vmatpush1.msra.mxu0 %v64
    %557 = vmatprep.subr.mxu0 0.0
    %558 = vmatpush1.msra.mxu0 %v63
    %559 = vmatprep.subr.mxu0 0.0
    %560 = vmatpush1.msra.mxu0 %v62
    %561 = vmatprep.subr.mxu0 0.0
    %562 = vmatpush1.msra.mxu0 %v61
    %563 = vmatprep.subr.mxu0 0.0
    %564 = vmatpush1.msra.mxu0 %v60
    %565 = vmatprep.subr.mxu0 0.0
    %566 = vmatpush2.msra.mxu0 0.0
    %567 = vmatprep.subr.mxu0 0.0
    %568 = vmatpush2.msra.mxu0 0.0
    %569 = vmatprep.subr.mxu0 0.0
    %570 = vmatpush2.msra.mxu0 0.0
    %571 = vmatprep.subr.mxu0 0.0
    %572 = vmatpush2.msra.mxu0 0.0
    %573 = vmatprep.subr.mxu0 0.0
    %574 = vmatpush2.msra.mxu0 0.0
    %575 = vmatprep.subr.mxu0 0.0
    %576 = vmatpush2.msra.mxu0 0.0
    %577 = vmatprep.subr.mxu0 0.0
    %578 = vmatpush2.msra.mxu0 0.0
    %579 = vmatprep.subr.mxu0 0.0
    %580 = vmatpush2.msra.mxu0 0.0
    %581 = vmatprep.subr.mxu0 0.0
    %582 = vmatpush2.msra.mxu0 0.0
    %583 = vmatprep.subr.mxu0 0.0
    %584 = vmatpush2.msra.mxu0 0.0
    %585 = vmatprep.subr.mxu0 0.0
    %586 = vmatpush2.msra.mxu0 0.0
    %587 = vmatprep.subr.mxu0 0.0
    %588 = vmatpush2.msra.mxu0 0.0
    %589 = vmatprep.subr.mxu0 0.0
    %590 = vmatpush2.msra.mxu0 0.0
    %591 = vmatprep.subr.mxu0 0.0
    %592 = vmatpush2.msra.mxu0 0.0
    %593 = vmatprep.subr.mxu0 0.0
    %594 = vmatpush2.msra.mxu0 0.0
    %595 = vmatprep.subr.mxu0 0.0
    %596 = vmatpush2.msra.mxu0 0.0
    %597 = vmatprep.mubr.f32.mxu0 0.0
    %598 = vmatmul.mubr.f32.gmra.mxu0 %v528
    %v599 = vpop.f32.mrf.mxu0
    %v600 = vadd.f32 0.0, %v599
    %v601 = vpop.f32.mrf.mxu0
    %602 = vdwg.mxu0
    %v603 = vadd.f32 %v532, %v600
    %v604 = vtanh.pop %v603
    %s605 = scalar_lea.vmem [#allocation9], 48
    %606 = vst [vmem:[%s605] sm:$0xff] %v604
    %s607 = scalar_lea.vmem [#allocation3], 56
    %v608 = vld [vmem:[%s607] sm:$0xff]
    %609 = vmatprep.subr.mxu0 0.0
    %610 = vmatpush1.msra.mxu0 %v75
    %611 = vmatprep.subr.mxu0 0.0
    %612 = vmatpush1.msra.mxu0 %v74
    %613 = vmatprep.subr.mxu0 0.0
    %614 = vmatpush1.msra.mxu0 %v73
    %615 = vmatprep.subr.mxu0 0.0
    %616 = vmatpush1.msra.mxu0 %v72
    %617 = vmatprep.subr.mxu0 0.0
    %618 = vmatpush1.msra.mxu0 %v71
    %619 = vmatprep.subr.mxu0 0.0
    %620 = vmatpush1.msra.mxu0 %v70
    %621 = vmatprep.subr.mxu0 0.0
    %622 = vmatpush1.msra.mxu0 %v69
    %623 = vmatprep.subr.mxu0 0.0
    %624 = vmatpush1.msra.mxu0 %v68
    %625 = vmatprep.subr.mxu0 0.0
    %626 = vmatpush1.msra.mxu0 %v67
    %627 = vmatprep.subr.mxu0 0.0
    %628 = vmatpush1.msra.mxu0 %v66
    %629 = vmatprep.subr.mxu0 0.0
    %630 = vmatpush1.msra.mxu0 %v65
    %631 = vmatprep.subr.mxu0 0.0
    %632 = vmatpush1.msra.mxu0 %v64
    %633 = vmatprep.subr.mxu0 0.0
    %634 = vmatpush1.msra.mxu0 %v63
    %635 = vmatprep.subr.mxu0 0.0
    %636 = vmatpush1.msra.mxu0 %v62
    %637 = vmatprep.subr.mxu0 0.0
    %638 = vmatpush1.msra.mxu0 %v61
    %639 = vmatprep.subr.mxu0 0.0
    %640 = vmatpush1.msra.mxu0 %v60
    %641 = vmatprep.subr.mxu0 0.0
    %642 = vmatpush2.msra.mxu0 0.0
    %643 = vmatprep.subr.mxu0 0.0
    %644 = vmatpush2.msra.mxu0 0.0
    %645 = vmatprep.subr.mxu0 0.0
    %646 = vmatpush2.msra.mxu0 0.0
    %647 = vmatprep.subr.mxu0 0.0
    %648 = vmatpush2.msra.mxu0 0.0
    %649 = vmatprep.subr.mxu0 0.0
    %650 = vmatpush2.msra.mxu0 0.0
    %651 = vmatprep.subr.mxu0 0.0
    %652 = vmatpush2.msra.mxu0 0.0
    %653 = vmatprep.subr.mxu0 0.0
    %654 = vmatpush2.msra.mxu0 0.0
    %655 = vmatprep.subr.mxu0 0.0
    %656 = vmatpush2.msra.mxu0 0.0
    %657 = vmatprep.subr.mxu0 0.0
    %658 = vmatpush2.msra.mxu0 0.0
    %659 = vmatprep.subr.mxu0 0.0
    %660 = vmatpush2.msra.mxu0 0.0
    %661 = vmatprep.subr.mxu0 0.0
    %662 = vmatpush2.msra.mxu0 0.0
    %663 = vmatprep.subr.mxu0 0.0
    %664 = vmatpush2.msra.mxu0 0.0
    %665 = vmatprep.subr.mxu0 0.0
    %666 = vmatpush2.msra.mxu0 0.0
    %667 = vmatprep.subr.mxu0 0.0
    %668 = vmatpush2.msra.mxu0 0.0
    %669 = vmatprep.subr.mxu0 0.0
    %670 = vmatpush2.msra.mxu0 0.0
    %671 = vmatprep.subr.mxu0 0.0
    %672 = vmatpush2.msra.mxu0 0.0
    %673 = vmatprep.mubr.f32.mxu0 0.0
    %674 = vmatmul.mubr.f32.gmra.mxu0 %v604
    %v675 = vpop.f32.mrf.mxu0
    %v676 = vadd.f32 0.0, %v675
    %v677 = vpop.f32.mrf.mxu0
    %678 = vdwg.mxu0
    %v679 = vadd.f32 %v608, %v676
    %v680 = vtanh.pop %v679
    %s681 = scalar_lea.vmem [#allocation9], 56
    %682 = vst [vmem:[%s681] sm:$0xff] %v680
    %683 = vst [vmem:[#allocation2] sm:$0xff] %v680
    // Predicated region
    $region30: #{tpu_custom_call.1} parent=1 // pred_check
      _
    $region31: #{tpu_custom_call.1} parent=1 // pred_check_branch
      %685 = sbr.rel (0) target = $region33
    $region32: #{tpu_custom_call.1} parent=1 // pred_region
      %s687 = ssub.s32 1024, 1024
      %688 = vsyncadd [#allocation5], %s687
      %s689 = sshll.u32 [#allocation9], 4
      %s690 = int_to_ptr.vmem [resolvable:$true] %s689
      %695 = dma.vmem_to_hbm [thread:$0]  %s690, 1024, %s3, [#allocation5], 128, 128, 8
    $region33: #{tpu_custom_call.1} parent=1 // pred_fallthru
      _
    // Predicated region
    $region34: #{tpu_custom_call.1} parent=1 // pred_check
      _
    $region35: #{tpu_custom_call.1} parent=1 // pred_check_branch
      %697 = sbr.rel (0) target = $region37
    $region36: #{tpu_custom_call.1} parent=1 // pred_region
      %698 = dma.done [#allocation5], 1024
    $region37: #{tpu_custom_call.1} parent=1 // pred_fallthru
      _
    %699 = vsyncpa [#allocation4], 1
    %700 = vsyncpa [#allocation7], 1
    %701 = vsyncpa [#allocation5], 1

</llo_original>
